<compile_context>
chip_gen: v5e
topology: v5e:2x2
jax: 0.10.0
libtpu: 0.0.40
codegen_flags: <defaults>
</compile_context>

<pallas_src>
import math
import jax
import jax.numpy as jnp
from jax.experimental import pallas as pl
from jax.experimental.pallas import tpu as pltpu  # noqa: F401  (kept for optional CompilerParams tuning)

# ----- model hyperparameters -----
S = 8          # sequence length
B = 2          # batch
E = 32         # input_dim / d_model
O = 8          # output_dim
H = 4          # nhead
DH = E // H    # head dim
F = 128        # dim_feedforward
L = 2          # num_layers
BS = B * S     # rows of the collapsed (batch*seq) slab
BHS = B * H * S
EPS = 1e-5     # LayerNorm eps (PyTorch default)
NEG = -1e9     # mask fill (stands in for -inf)
LANES = 128    # lane width of the packed slabs

# ----- bf16 weight-slab row offsets (all multiples of 16 = bf16 sublane tile) -----
W_QKV_OFF = 0                      # (L*E, 128)  [Wq*scale | Wk | Wv | 0]
W_FF1_OFF = W_QKV_OFF + L * E      # (L*E, F)
W_FF2_OFF = W_FF1_OFF + L * E      # (L*F, E)
W_O_OFF = W_FF2_OFF + L * F        # (L*E, E)
ENC_W_OFF = W_O_OFF + L * E        # (E, E)
DEC_W_OFF = ENC_W_OFF + E          # (E, O)
R_OFF = DEC_W_OFF + E              # (BHS, BS)   row-replication 0/1 matrix
BLK3_OFF = R_OFF + BHS             # (BHS, 3E)   [blk | blk | blk] head-lane selector
SEL_OFF = BLK3_OFF + BHS           # (B, BS)     last-timestep row selector
W_ROWS = 656                       # padded to a multiple of 16

# ----- f32 constant-slab row offsets -----
PEB_OFF = 0                        # (BS, E)   positional enc + encoder bias
AMASK_OFF = PEB_OFF + BS           # (BS, BHS) additive causal + cross-batch mask
VEC_OFF = AMASK_OFF + BS           # (L*4, 128) per-layer bias / LN vectors
DECB_OFF = VEC_OFF + 4 * L         # (1, O)
C_ROWS = 48


# --------------------------- Pallas kernel (single program) ---------------------------
def transformer_kernel(x_ref, c_ref, w_ref, o_ref):
    f32, bf16 = jnp.float32, jnp.bfloat16

    amask = c_ref[AMASK_OFF:AMASK_OFF + BS, :BHS]          # (BS, BHS) f32
    rep = w_ref[R_OFF:R_OFF + BHS, :BS]                    # (BHS, BS) bf16 0/1
    blk3 = w_ref[BLK3_OFF:BLK3_OFF + BHS, :3 * E]          # (BHS, 3E) bf16 0/1

    # encoder Linear; positional encoding + encoder bias pre-folded into peb on host
    x = jnp.dot(x_ref[...].astype(bf16), w_ref[ENC_W_OFF:ENC_W_OFF + E, :E],
                preferred_element_type=f32) + c_ref[PEB_OFF:PEB_OFF + BS, :E]   # (BS, E) f32

    def layer_norm(y, w, b):
        # var = E[y^2] - mu^2 so both XLU reductions depend only on y (issue back-to-back)
        mu = jnp.mean(y, axis=-1, keepdims=True)
        ms = jnp.mean(y * y, axis=-1, keepdims=True)
        return (y - mu) * jax.lax.rsqrt(ms - mu * mu + EPS) * w + b

    for l in range(L):                                     # static unroll (L=2)
        vrow = VEC_OFF + 4 * l
        xb = x.astype(bf16)

        # fused [Q | K | V | 1] projection: one (BS,E)@(E,128) MXU push.
        # Wq & bq pre-scaled by 1/sqrt(DH); 4th block is zeros weight + ones bias.
        qkv1 = jnp.dot(xb, w_ref[W_QKV_OFF + l * E: W_QKV_OFF + (l + 1) * E, :],
                       preferred_element_type=f32) + c_ref[vrow:vrow + 1, :]    # (BS, 128)
        qkv1_bf = qkv1.astype(bf16)                        # single bf16 cast for q/k/v
        q = qkv1_bf[:, :E]                                 # (BS, E)
        kv1 = qkv1_bf[:, E:]                               # (BS, 3E) = [k | v | 1]

        # replicate rows per (batch, head) with ONE matmul against the 0/1 matrix, then
        # zero the other heads' lanes. Last 32 lanes become blk itself (via the ones column).
        kv1_rep = jnp.dot(rep, kv1, preferred_element_type=f32).astype(bf16) * blk3  # (BHS, 3E)
        k_rep = kv1_rep[:, :E]                             # (BHS, E)
        vd_rhs = kv1_rep[:, E:]                            # (BHS, 2E) = [v_rep*blk | blk]

        # all batches & heads in one MXU push: (BS,E) x (BHS,E)^T -> (BS, BHS)
        scores = jax.lax.dot_general(q, k_rep, (((1,), (1,)), ((), ())),
                                     preferred_element_type=f32) + amask
        scores = scores - jnp.max(scores, axis=-1, keepdims=True)      # one reduce per layer
        p = jnp.exp(scores).astype(bf16)
        # fused context + per-head softmax denominator: one (BS,BHS)@(BHS,2E) push
        cd = jnp.dot(p, vd_rhs, preferred_element_type=f32)            # (BS, 2E)
        ctx = cd[:, :E] * pl.reciprocal(cd[:, E:], approx=True)        # (BS, E)

        attn = jnp.dot(ctx.astype(bf16),
                       w_ref[W_O_OFF + l * E: W_O_OFF + (l + 1) * E, :E],
                       preferred_element_type=f32) + c_ref[vrow + 2:vrow + 3, :E]
        # TODO(synk): dropout omitted — eval-mode identity
        x = layer_norm(x + attn,
                       c_ref[vrow + 2:vrow + 3, E:2 * E],
                       c_ref[vrow + 2:vrow + 3, 2 * E:3 * E])

        # feed-forward: relu(x W1 + b1) W2 + b2, residual + post-LayerNorm
        h1 = jnp.maximum(
            jnp.dot(x.astype(bf16),
                    w_ref[W_FF1_OFF + l * E: W_FF1_OFF + (l + 1) * E, :],
                    preferred_element_type=f32) + c_ref[vrow + 1:vrow + 2, :], 0.0)
        h2 = jnp.dot(h1.astype(bf16),
                     w_ref[W_FF2_OFF + l * F: W_FF2_OFF + (l + 1) * F, :E],
                     preferred_element_type=f32) + c_ref[vrow + 2:vrow + 3, 3 * E:4 * E]
        x = layer_norm(x + h2,
                       c_ref[vrow + 3:vrow + 4, :E],
                       c_ref[vrow + 3:vrow + 4, E:2 * E])

    # decode only the final timestep of each batch element (== output[-1]):
    # row-select via a tiny 0/1 matmul (exact copies), then the decoder matmul.
    last = jnp.dot(w_ref[SEL_OFF:SEL_OFF + B, :BS], x.astype(bf16),
                   preferred_element_type=f32).astype(bf16)             # (B, E)
    o_ref[...] = jnp.dot(last, w_ref[DEC_W_OFF:DEC_W_OFF + E, :O],
                         preferred_element_type=f32) + c_ref[DECB_OFF:DECB_OFF + 1, :O]


# --------------------------- host-side glue (src-independent, runs once) ---------------------------
def positional_encoding(seq, d):
    pos = jnp.arange(seq, dtype=jnp.float32)[:, None]
    div = jnp.exp(jnp.arange(0, d, 2, dtype=jnp.float32) * (-math.log(10000.0) / d))
    pe = jnp.zeros((seq, d), jnp.float32)
    pe = pe.at[:, 0::2].set(jnp.sin(pos * div))
    pe = pe.at[:, 1::2].set(jnp.cos(pos * div))
    return pe


def _build_masks():
    rows = jnp.arange(BS)
    cols = jnp.arange(BHS)                      # column index = b*H*S + h*S + t
    row_b, row_s = rows // S, rows % S
    col_b, col_h, col_t = cols // (H * S), (cols % (H * S)) // S, cols % S
    ok = (row_b[:, None] == col_b[None, :]) & (col_t[None, :] <= row_s[:, None])
    amask = jnp.where(ok, 0.0, NEG).astype(jnp.float32)                  # (BS, BHS)
    lane_h = jnp.arange(E) // DH
    blk = (col_h[:, None] == lane_h[None, :]).astype(jnp.float32)        # (BHS, E)
    # rep[(b,h,t), (b',s)] = 1 iff b'==b and s==t   (row replication per batch/head)
    rep = ((col_b[:, None] == row_b[None, :]) &
           (col_t[:, None] == row_s[None, :])).astype(jnp.float32)       # (BHS, BS)
    sel = jnp.zeros((B, BS), jnp.float32).at[
        jnp.arange(B), jnp.arange(B) * S + S - 1].set(1.0)               # (B, BS)
    return amask, blk, rep, sel


def init_params(key):
    keys = iter(jax.random.split(key, 16))
    u = lambda shape: jax.random.uniform(next(keys), shape, jnp.float32, -0.1, 0.1)
    return dict(
        enc_w=u((E, E)), enc_b=u((E,)),
        dec_w=u((O, E)), dec_b=u((O,)),
        in_w=u((L, 3 * E, E)), in_b=u((L, 3 * E)),
        out_w=u((L, E, E)), out_b=u((L, E)),
        ff1_w=u((L, F, E)), ff1_b=u((L, F)),
        ff2_w=u((L, E, F)), ff2_b=u((L, E)),
        ln1_w=jnp.ones((L, E), jnp.float32), ln1_b=jnp.zeros((L, E), jnp.float32),
        ln2_w=jnp.ones((L, E), jnp.float32), ln2_b=jnp.zeros((L, E), jnp.float32),
    )


def pack_params(p):
    """Build the two packed slabs (bf16 weights, f32 constants). Call ONCE per parameter set."""
    scale = 1.0 / math.sqrt(DH)
    amask, blk, rep, sel = _build_masks()

    # ---- bf16 weight slab (W_ROWS, 128) ----
    w = jnp.zeros((W_ROWS, LANES), jnp.float32)
    wq = jnp.transpose(p['in_w'][:, :E, :], (0, 2, 1)) * scale           # (L, E, E), (in,out)
    wk = jnp.transpose(p['in_w'][:, E:2 * E, :], (0, 2, 1))
    wv = jnp.transpose(p['in_w'][:, 2 * E:, :], (0, 2, 1))
    w_qkv4 = jnp.concatenate([wq, wk, wv, jnp.zeros((L, E, E))], axis=2)  # (L, E, 128)
    w = w.at[W_QKV_OFF:W_QKV_OFF + L * E, :].set(w_qkv4.reshape(L * E, LANES))
    w = w.at[W_FF1_OFF:W_FF1_OFF + L * E, :F].set(
        jnp.transpose(p['ff1_w'], (0, 2, 1)).reshape(L * E, F))
    w = w.at[W_FF2_OFF:W_FF2_OFF + L * F, :E].set(
        jnp.transpose(p['ff2_w'], (0, 2, 1)).reshape(L * F, E))
    w = w.at[W_O_OFF:W_O_OFF + L * E, :E].set(
        jnp.transpose(p['out_w'], (0, 2, 1)).reshape(L * E, E))
    w = w.at[ENC_W_OFF:ENC_W_OFF + E, :E].set(p['enc_w'].T)
    w = w.at[DEC_W_OFF:DEC_W_OFF + E, :O].set(p['dec_w'].T)
    w = w.at[R_OFF:R_OFF + BHS, :BS].set(rep)
    w = w.at[BLK3_OFF:BLK3_OFF + BHS, :3 * E].set(
        jnp.concatenate([blk, blk, blk], axis=1))
    w = w.at[SEL_OFF:SEL_OFF + B, :BS].set(sel)
    w = w.astype(jnp.bfloat16)

    # ---- f32 constant slab (C_ROWS, 128) ----
    c = jnp.zeros((C_ROWS, LANES), jnp.float32)
    peb = jnp.tile(positional_encoding(S, E), (B, 1)) + p['enc_b'][None, :]
    c = c.at[PEB_OFF:PEB_OFF + BS, :E].set(peb)
    c = c.at[AMASK_OFF:AMASK_OFF + BS, :BHS].set(amask)
    b_qkv4 = jnp.concatenate([p['in_b'][:, :E] * scale, p['in_b'][:, E:2 * E],
                              p['in_b'][:, 2 * E:], jnp.ones((L, E))], axis=1)   # (L, 128)
    row2 = jnp.concatenate([p['out_b'], p['ln1_w'], p['ln1_b'], p['ff2_b']], axis=1)
    row3 = jnp.concatenate([p['ln2_w'], p['ln2_b'], jnp.zeros((L, 2 * E))], axis=1)
    vecs = jnp.stack([b_qkv4, p['ff1_b'], row2, row3], axis=1).reshape(L * 4, LANES)
    c = c.at[VEC_OFF:VEC_OFF + L * 4, :].set(vecs)
    c = c.at[DECB_OFF, :O].set(p['dec_b'])
    return w, c


@jax.jit
def transformer_forward(src, w_slab, c_slab):
    """src: (S, B, E) float32 (PyTorch seq-first). Returns (B, O) == output[-1]."""
    x2d = jnp.transpose(src, (1, 0, 2)).reshape(BS, E)    # batch-major rows, per-call only
    return pl.pallas_call(
        transformer_kernel,
        out_shape=jax.ShapeDtypeStruct((B, O), jnp.float32),
    )(x2d, c_slab, w_slab)


# --------------------------- pure-JAX f32 reference ---------------------------
def reference_forward(src, p):
    pe = positional_encoding(S, E)
    r = jnp.arange(S)
    mask = jnp.where(r[None, :] <= r[:, None], 0.0, NEG).astype(jnp.float32)

    def ln(y, w, b):
        mu = jnp.mean(y, axis=-1, keepdims=True)
        var = jnp.mean((y - mu) ** 2, axis=-1, keepdims=True)
        return (y - mu) / jnp.sqrt(var + EPS) * w + b

    x = src @ p['enc_w'].T + p['enc_b']                  # (S, B, E)
    x = x + pe[:, None, :]
    for l in range(L):
        qkv = x @ p['in_w'][l].T + p['in_b'][l]          # (S, B, 3E)
        q = qkv[..., :E].reshape(S, B, H, DH)
        k = qkv[..., E:2 * E].reshape(S, B, H, DH)
        v = qkv[..., 2 * E:].reshape(S, B, H, DH)
        scores = jnp.einsum('sbhd,tbhd->bhst', q, k) / math.sqrt(DH) + mask
        attn = jax.nn.softmax(scores, axis=-1)
        ctx = jnp.einsum('bhst,tbhd->sbhd', attn, v).reshape(S, B, E)
        x = ln(x + ctx @ p['out_w'][l].T + p['out_b'][l], p['ln1_w'][l], p['ln1_b'][l])
        ff = jnp.maximum(x @ p['ff1_w'][l].T + p['ff1_b'][l], 0.0) @ p['ff2_w'][l].T + p['ff2_b'][l]
        x = ln(x + ff, p['ln2_w'][l], p['ln2_b'][l])
    out = x @ p['dec_w'].T + p['dec_b']
    return out[-1]                                       # (B, O)


if __name__ == "__main__":
    key = jax.random.PRNGKey(0)
    k_param, k_src = jax.random.split(key)
    params = init_params(k_param)
    src = jax.random.normal(k_src, (S, B, E), jnp.float32)   # (seq, batch, input_dim)

    w_slab, c_slab = pack_params(params)     # hoisted: src-independent, runs once
    y = jax.block_until_ready(transformer_forward(src, w_slab, c_slab))
    y_ref = jax.block_until_ready(reference_forward(src, params))

    assert y.shape == (B, O), y.shape
    # kernel uses bf16 matmul inputs with f32 accumulation; reference is pure f32
    assert jnp.allclose(y, y_ref, rtol=3e-2, atol=3e-2), (y, y_ref)
    print("KERNEL_OK")
</pallas_src>

<mosaic_0001>
module attributes {stable_mosaic.version = 11 : i64} {
  func.func @transformer_kernel(%arg0: memref<16x32xf32, #tpu.memory_space<vmem>>, %arg1: memref<48x128xf32, #tpu.memory_space<vmem>>, %arg2: memref<656x128xbf16, #tpu.memory_space<vmem>>, %arg3: memref<2x8xf32, #tpu.memory_space<vmem>>) attributes {dimension_semantics = [], scalar_prefetch = 0 : i64, scratch_operands = 0 : i64, tpu.core_type = #tpu.core_type<tc>} {
    %c16 = arith.constant 16 : index
    %c0 = arith.constant 0 : index
    %0 = vector.load %arg1[%c16, %c0] : memref<48x128xf32, #tpu.memory_space<vmem>>, vector<16x64xf32>
    %c512 = arith.constant 512 : index
    %c0_0 = arith.constant 0 : index
    %1 = vector.load %arg2[%c512, %c0_0] : memref<656x128xbf16, #tpu.memory_space<vmem>>, vector<64x16xbf16>
    %c576 = arith.constant 576 : index
    %c0_1 = arith.constant 0 : index
    %2 = vector.load %arg2[%c576, %c0_1] : memref<656x128xbf16, #tpu.memory_space<vmem>>, vector<64x96xbf16>
    %c0_2 = arith.constant 0 : index
    %c0_3 = arith.constant 0 : index
    %3 = vector.load %arg0[%c0_2, %c0_3] : memref<16x32xf32, #tpu.memory_space<vmem>>, vector<16x32xf32>
    %4 = arith.truncf %3 : vector<16x32xf32> to vector<16x32xbf16>
    %c448 = arith.constant 448 : index
    %c0_4 = arith.constant 0 : index
    %5 = vector.load %arg2[%c448, %c0_4] : memref<656x128xbf16, #tpu.memory_space<vmem>>, vector<32x32xbf16>
    %cst = arith.constant dense<0.000000e+00> : vector<16x32xf32>
    %6 = tpu.matmul %4, %5, %cst {dimension_numbers = #tpu.dot_dimension_numbers<[1], [0], [0], [1], [0, 0, 1, 1], [], []>} : vector<16x32xbf16>, vector<32x32xbf16>, vector<16x32xf32> -> vector<16x32xf32>
    %c0_5 = arith.constant 0 : index
    %c0_6 = arith.constant 0 : index
    %7 = vector.load %arg1[%c0_5, %c0_6] : memref<48x128xf32, #tpu.memory_space<vmem>>, vector<16x32xf32>
    %8 = arith.addf %6, %7 : vector<16x32xf32>
    %9 = arith.truncf %8 : vector<16x32xf32> to vector<16x32xbf16>
    %c0_7 = arith.constant 0 : index
    %c0_8 = arith.constant 0 : index
    %10 = vector.load %arg2[%c0_7, %c0_8] : memref<656x128xbf16, #tpu.memory_space<vmem>>, vector<32x128xbf16>
    %cst_9 = arith.constant dense<0.000000e+00> : vector<16x128xf32>
    %11 = tpu.matmul %9, %10, %cst_9 {dimension_numbers = #tpu.dot_dimension_numbers<[1], [0], [0], [1], [0, 0, 1, 1], [], []>} : vector<16x32xbf16>, vector<32x128xbf16>, vector<16x128xf32> -> vector<16x128xf32>
    %c32 = arith.constant 32 : index
    %c0_10 = arith.constant 0 : index
    %12 = vector.load %arg1[%c32, %c0_10] : memref<48x128xf32, #tpu.memory_space<vmem>>, vector<1x128xf32>
    %13 = vector.broadcast %12 : vector<1x128xf32> to vector<16x128xf32>
    %14 = arith.addf %11, %13 : vector<16x128xf32>
    %15 = arith.truncf %14 : vector<16x128xf32> to vector<16x128xbf16>
    %16 = vector.extract_strided_slice %15 {offsets = [0, 0], sizes = [16, 32], strides = [1, 1]} : vector<16x128xbf16> to vector<16x32xbf16>
    %17 = vector.extract_strided_slice %15 {offsets = [0, 32], sizes = [16, 96], strides = [1, 1]} : vector<16x128xbf16> to vector<16x96xbf16>
    %cst_11 = arith.constant dense<0.000000e+00> : vector<64x96xf32>
    %18 = tpu.matmul %1, %17, %cst_11 {dimension_numbers = #tpu.dot_dimension_numbers<[1], [0], [0], [1], [0, 0, 1, 1], [], []>} : vector<64x16xbf16>, vector<16x96xbf16>, vector<64x96xf32> -> vector<64x96xf32>
    %19 = arith.truncf %18 : vector<64x96xf32> to vector<64x96xbf16>
    %20 = arith.mulf %19, %2 : vector<64x96xbf16>
    %21 = vector.extract_strided_slice %20 {offsets = [0, 0], sizes = [64, 32], strides = [1, 1]} : vector<64x96xbf16> to vector<64x32xbf16>
    %22 = vector.extract_strided_slice %20 {offsets = [0, 32], sizes = [64, 64], strides = [1, 1]} : vector<64x96xbf16> to vector<64x64xbf16>
    %cst_12 = arith.constant dense<0.000000e+00> : vector<16x64xf32>
    %23 = tpu.matmul %16, %21, %cst_12 {dimension_numbers = #tpu.dot_dimension_numbers<[1], [1], [0], [0], [0, 0, 1, 0], [], []>} : vector<16x32xbf16>, vector<64x32xbf16>, vector<16x64xf32> -> vector<16x64xf32>
    %24 = arith.addf %23, %0 : vector<16x64xf32>
    %cst_13 = arith.constant dense<0xFF800000> : vector<16xf32>
    %25 = vector.multi_reduction <maximumf>, %24, %cst_13 [1] : vector<16x64xf32> to vector<16xf32>
    %26 = vector.shape_cast %25 : vector<16xf32> to vector<16x1xf32>
    %27 = vector.broadcast %26 : vector<16x1xf32> to vector<16x64xf32>
    %28 = arith.subf %24, %27 : vector<16x64xf32>
    %29 = math.exp %28 : vector<16x64xf32>
    %30 = arith.truncf %29 : vector<16x64xf32> to vector<16x64xbf16>
    %cst_14 = arith.constant dense<0.000000e+00> : vector<16x64xf32>
    %31 = tpu.matmul %30, %22, %cst_14 {dimension_numbers = #tpu.dot_dimension_numbers<[1], [0], [0], [1], [0, 0, 1, 1], [], []>} : vector<16x64xbf16>, vector<64x64xbf16>, vector<16x64xf32> -> vector<16x64xf32>
    %32 = vector.extract_strided_slice %31 {offsets = [0, 0], sizes = [16, 32], strides = [1, 1]} : vector<16x64xf32> to vector<16x32xf32>
    %33 = vector.extract_strided_slice %31 {offsets = [0, 32], sizes = [16, 32], strides = [1, 1]} : vector<16x64xf32> to vector<16x32xf32>
    %34 = tpu.reciprocal %33 {approx = true} : vector<16x32xf32> -> vector<16x32xf32>
    %35 = arith.mulf %32, %34 : vector<16x32xf32>
    %36 = arith.truncf %35 : vector<16x32xf32> to vector<16x32xbf16>
    %c384 = arith.constant 384 : index
    %c0_15 = arith.constant 0 : index
    %37 = vector.load %arg2[%c384, %c0_15] : memref<656x128xbf16, #tpu.memory_space<vmem>>, vector<32x32xbf16>
    %cst_16 = arith.constant dense<0.000000e+00> : vector<16x32xf32>
    %38 = tpu.matmul %36, %37, %cst_16 {dimension_numbers = #tpu.dot_dimension_numbers<[1], [0], [0], [1], [0, 0, 1, 1], [], []>} : vector<16x32xbf16>, vector<32x32xbf16>, vector<16x32xf32> -> vector<16x32xf32>
    %c34 = arith.constant 34 : index
    %c0_17 = arith.constant 0 : index
    %39 = vector.load %arg1[%c34, %c0_17] : memref<48x128xf32, #tpu.memory_space<vmem>>, vector<1x32xf32>
    %40 = vector.broadcast %39 : vector<1x32xf32> to vector<16x32xf32>
    %41 = arith.addf %38, %40 : vector<16x32xf32>
    %42 = arith.addf %8, %41 : vector<16x32xf32>
    %c34_18 = arith.constant 34 : index
    %c32_19 = arith.constant 32 : index
    %43 = vector.load %arg1[%c34_18, %c32_19] : memref<48x128xf32, #tpu.memory_space<vmem>>, vector<1x32xf32>
    %c34_20 = arith.constant 34 : index
    %c64 = arith.constant 64 : index
    %44 = vector.load %arg1[%c34_20, %c64] : memref<48x128xf32, #tpu.memory_space<vmem>>, vector<1x32xf32>
    %cst_21 = arith.constant dense<0.000000e+00> : vector<16xf32>
    %45 = vector.multi_reduction <add>, %42, %cst_21 [1] : vector<16x32xf32> to vector<16xf32>
    %46 = vector.shape_cast %45 : vector<16xf32> to vector<16x1xf32>
    %cst_22 = arith.constant 3.200000e+01 : f32
    %47 = vector.broadcast %cst_22 : f32 to vector<16x1xf32>
    %48 = arith.divf %46, %47 : vector<16x1xf32>
    %49 = arith.mulf %42, %42 : vector<16x32xf32>
    %cst_23 = arith.constant dense<0.000000e+00> : vector<16xf32>
    %50 = vector.multi_reduction <add>, %49, %cst_23 [1] : vector<16x32xf32> to vector<16xf32>
    %51 = vector.shape_cast %50 : vector<16xf32> to vector<16x1xf32>
    %cst_24 = arith.constant 3.200000e+01 : f32
    %52 = vector.broadcast %cst_24 : f32 to vector<16x1xf32>
    %53 = arith.divf %51, %52 : vector<16x1xf32>
    %54 = vector.broadcast %48 : vector<16x1xf32> to vector<16x32xf32>
    %55 = arith.subf %42, %54 : vector<16x32xf32>
    %56 = arith.mulf %48, %48 : vector<16x1xf32>
    %57 = arith.subf %53, %56 : vector<16x1xf32>
    %cst_25 = arith.constant 9.99999974E-6 : f32
    %58 = vector.broadcast %cst_25 : f32 to vector<16x1xf32>
    %59 = arith.addf %57, %58 : vector<16x1xf32>
    %60 = math.rsqrt %59 : vector<16x1xf32>
    %61 = vector.broadcast %60 : vector<16x1xf32> to vector<16x32xf32>
    %62 = arith.mulf %55, %61 : vector<16x32xf32>
    %63 = vector.broadcast %43 : vector<1x32xf32> to vector<16x32xf32>
    %64 = arith.mulf %62, %63 : vector<16x32xf32>
    %65 = vector.broadcast %44 : vector<1x32xf32> to vector<16x32xf32>
    %66 = arith.addf %64, %65 : vector<16x32xf32>
    %67 = arith.truncf %66 : vector<16x32xf32> to vector<16x32xbf16>
    %c64_26 = arith.constant 64 : index
    %c0_27 = arith.constant 0 : index
    %68 = vector.load %arg2[%c64_26, %c0_27] : memref<656x128xbf16, #tpu.memory_space<vmem>>, vector<32x128xbf16>
    %cst_28 = arith.constant dense<0.000000e+00> : vector<16x128xf32>
    %69 = tpu.matmul %67, %68, %cst_28 {dimension_numbers = #tpu.dot_dimension_numbers<[1], [0], [0], [1], [0, 0, 1, 1], [], []>} : vector<16x32xbf16>, vector<32x128xbf16>, vector<16x128xf32> -> vector<16x128xf32>
    %c33 = arith.constant 33 : index
    %c0_29 = arith.constant 0 : index
    %70 = vector.load %arg1[%c33, %c0_29] : memref<48x128xf32, #tpu.memory_space<vmem>>, vector<1x128xf32>
    %71 = vector.broadcast %70 : vector<1x128xf32> to vector<16x128xf32>
    %72 = arith.addf %69, %71 : vector<16x128xf32>
    %cst_30 = arith.constant 0.000000e+00 : f32
    %73 = vector.broadcast %cst_30 : f32 to vector<16x128xf32>
    %74 = arith.maximumf %72, %73 : vector<16x128xf32>
    %75 = arith.truncf %74 : vector<16x128xf32> to vector<16x128xbf16>
    %c128 = arith.constant 128 : index
    %c0_31 = arith.constant 0 : index
    %76 = vector.load %arg2[%c128, %c0_31] : memref<656x128xbf16, #tpu.memory_space<vmem>>, vector<128x32xbf16>
    %cst_32 = arith.constant dense<0.000000e+00> : vector<16x32xf32>
    %77 = tpu.matmul %75, %76, %cst_32 {dimension_numbers = #tpu.dot_dimension_numbers<[1], [0], [0], [1], [0, 0, 1, 1], [], []>} : vector<16x128xbf16>, vector<128x32xbf16>, vector<16x32xf32> -> vector<16x32xf32>
    %c34_33 = arith.constant 34 : index
    %c96 = arith.constant 96 : index
    %78 = vector.load %arg1[%c34_33, %c96] : memref<48x128xf32, #tpu.memory_space<vmem>>, vector<1x32xf32>
    %79 = vector.broadcast %78 : vector<1x32xf32> to vector<16x32xf32>
    %80 = arith.addf %77, %79 : vector<16x32xf32>
    %81 = arith.addf %66, %80 : vector<16x32xf32>
    %c35 = arith.constant 35 : index
    %c0_34 = arith.constant 0 : index
    %82 = vector.load %arg1[%c35, %c0_34] : memref<48x128xf32, #tpu.memory_space<vmem>>, vector<1x32xf32>
    %c35_35 = arith.constant 35 : index
    %c32_36 = arith.constant 32 : index
    %83 = vector.load %arg1[%c35_35, %c32_36] : memref<48x128xf32, #tpu.memory_space<vmem>>, vector<1x32xf32>
    %cst_37 = arith.constant dense<0.000000e+00> : vector<16xf32>
    %84 = vector.multi_reduction <add>, %81, %cst_37 [1] : vector<16x32xf32> to vector<16xf32>
    %85 = vector.shape_cast %84 : vector<16xf32> to vector<16x1xf32>
    %cst_38 = arith.constant 3.200000e+01 : f32
    %86 = vector.broadcast %cst_38 : f32 to vector<16x1xf32>
    %87 = arith.divf %85, %86 : vector<16x1xf32>
    %88 = arith.mulf %81, %81 : vector<16x32xf32>
    %cst_39 = arith.constant dense<0.000000e+00> : vector<16xf32>
    %89 = vector.multi_reduction <add>, %88, %cst_39 [1] : vector<16x32xf32> to vector<16xf32>
    %90 = vector.shape_cast %89 : vector<16xf32> to vector<16x1xf32>
    %cst_40 = arith.constant 3.200000e+01 : f32
    %91 = vector.broadcast %cst_40 : f32 to vector<16x1xf32>
    %92 = arith.divf %90, %91 : vector<16x1xf32>
    %93 = vector.broadcast %87 : vector<16x1xf32> to vector<16x32xf32>
    %94 = arith.subf %81, %93 : vector<16x32xf32>
    %95 = arith.mulf %87, %87 : vector<16x1xf32>
    %96 = arith.subf %92, %95 : vector<16x1xf32>
    %cst_41 = arith.constant 9.99999974E-6 : f32
    %97 = vector.broadcast %cst_41 : f32 to vector<16x1xf32>
    %98 = arith.addf %96, %97 : vector<16x1xf32>
    %99 = math.rsqrt %98 : vector<16x1xf32>
    %100 = vector.broadcast %99 : vector<16x1xf32> to vector<16x32xf32>
    %101 = arith.mulf %94, %100 : vector<16x32xf32>
    %102 = vector.broadcast %82 : vector<1x32xf32> to vector<16x32xf32>
    %103 = arith.mulf %101, %102 : vector<16x32xf32>
    %104 = vector.broadcast %83 : vector<1x32xf32> to vector<16x32xf32>
    %105 = arith.addf %103, %104 : vector<16x32xf32>
    %106 = arith.truncf %105 : vector<16x32xf32> to vector<16x32xbf16>
    %c32_42 = arith.constant 32 : index
    %c0_43 = arith.constant 0 : index
    %107 = vector.load %arg2[%c32_42, %c0_43] : memref<656x128xbf16, #tpu.memory_space<vmem>>, vector<32x128xbf16>
    %cst_44 = arith.constant dense<0.000000e+00> : vector<16x128xf32>
    %108 = tpu.matmul %106, %107, %cst_44 {dimension_numbers = #tpu.dot_dimension_numbers<[1], [0], [0], [1], [0, 0, 1, 1], [], []>} : vector<16x32xbf16>, vector<32x128xbf16>, vector<16x128xf32> -> vector<16x128xf32>
    %c36 = arith.constant 36 : index
    %c0_45 = arith.constant 0 : index
    %109 = vector.load %arg1[%c36, %c0_45] : memref<48x128xf32, #tpu.memory_space<vmem>>, vector<1x128xf32>
    %110 = vector.broadcast %109 : vector<1x128xf32> to vector<16x128xf32>
    %111 = arith.addf %108, %110 : vector<16x128xf32>
    %112 = arith.truncf %111 : vector<16x128xf32> to vector<16x128xbf16>
    %113 = vector.extract_strided_slice %112 {offsets = [0, 0], sizes = [16, 32], strides = [1, 1]} : vector<16x128xbf16> to vector<16x32xbf16>
    %114 = vector.extract_strided_slice %112 {offsets = [0, 32], sizes = [16, 96], strides = [1, 1]} : vector<16x128xbf16> to vector<16x96xbf16>
    %cst_46 = arith.constant dense<0.000000e+00> : vector<64x96xf32>
    %115 = tpu.matmul %1, %114, %cst_46 {dimension_numbers = #tpu.dot_dimension_numbers<[1], [0], [0], [1], [0, 0, 1, 1], [], []>} : vector<64x16xbf16>, vector<16x96xbf16>, vector<64x96xf32> -> vector<64x96xf32>
    %116 = arith.truncf %115 : vector<64x96xf32> to vector<64x96xbf16>
    %117 = arith.mulf %116, %2 : vector<64x96xbf16>
    %118 = vector.extract_strided_slice %117 {offsets = [0, 0], sizes = [64, 32], strides = [1, 1]} : vector<64x96xbf16> to vector<64x32xbf16>
    %119 = vector.extract_strided_slice %117 {offsets = [0, 32], sizes = [64, 64], strides = [1, 1]} : vector<64x96xbf16> to vector<64x64xbf16>
    %cst_47 = arith.constant dense<0.000000e+00> : vector<16x64xf32>
    %120 = tpu.matmul %113, %118, %cst_47 {dimension_numbers = #tpu.dot_dimension_numbers<[1], [1], [0], [0], [0, 0, 1, 0], [], []>} : vector<16x32xbf16>, vector<64x32xbf16>, vector<16x64xf32> -> vector<16x64xf32>
    %121 = arith.addf %120, %0 : vector<16x64xf32>
    %cst_48 = arith.constant dense<0xFF800000> : vector<16xf32>
    %122 = vector.multi_reduction <maximumf>, %121, %cst_48 [1] : vector<16x64xf32> to vector<16xf32>
    %123 = vector.shape_cast %122 : vector<16xf32> to vector<16x1xf32>
    %124 = vector.broadcast %123 : vector<16x1xf32> to vector<16x64xf32>
    %125 = arith.subf %121, %124 : vector<16x64xf32>
    %126 = math.exp %125 : vector<16x64xf32>
    %127 = arith.truncf %126 : vector<16x64xf32> to vector<16x64xbf16>
    %cst_49 = arith.constant dense<0.000000e+00> : vector<16x64xf32>
    %128 = tpu.matmul %127, %119, %cst_49 {dimension_numbers = #tpu.dot_dimension_numbers<[1], [0], [0], [1], [0, 0, 1, 1], [], []>} : vector<16x64xbf16>, vector<64x64xbf16>, vector<16x64xf32> -> vector<16x64xf32>
    %129 = vector.extract_strided_slice %128 {offsets = [0, 0], sizes = [16, 32], strides = [1, 1]} : vector<16x64xf32> to vector<16x32xf32>
    %130 = vector.extract_strided_slice %128 {offsets = [0, 32], sizes = [16, 32], strides = [1, 1]} : vector<16x64xf32> to vector<16x32xf32>
    %131 = tpu.reciprocal %130 {approx = true} : vector<16x32xf32> -> vector<16x32xf32>
    %132 = arith.mulf %129, %131 : vector<16x32xf32>
    %133 = arith.truncf %132 : vector<16x32xf32> to vector<16x32xbf16>
    %c416 = arith.constant 416 : index
    %c0_50 = arith.constant 0 : index
    %134 = vector.load %arg2[%c416, %c0_50] : memref<656x128xbf16, #tpu.memory_space<vmem>>, vector<32x32xbf16>
    %cst_51 = arith.constant dense<0.000000e+00> : vector<16x32xf32>
    %135 = tpu.matmul %133, %134, %cst_51 {dimension_numbers = #tpu.dot_dimension_numbers<[1], [0], [0], [1], [0, 0, 1, 1], [], []>} : vector<16x32xbf16>, vector<32x32xbf16>, vector<16x32xf32> -> vector<16x32xf32>
    %c38 = arith.constant 38 : index
    %c0_52 = arith.constant 0 : index
    %136 = vector.load %arg1[%c38, %c0_52] : memref<48x128xf32, #tpu.memory_space<vmem>>, vector<1x32xf32>
    %137 = vector.broadcast %136 : vector<1x32xf32> to vector<16x32xf32>
    %138 = arith.addf %135, %137 : vector<16x32xf32>
    %139 = arith.addf %105, %138 : vector<16x32xf32>
    %c38_53 = arith.constant 38 : index
    %c32_54 = arith.constant 32 : index
    %140 = vector.load %arg1[%c38_53, %c32_54] : memref<48x128xf32, #tpu.memory_space<vmem>>, vector<1x32xf32>
    %c38_55 = arith.constant 38 : index
    %c64_56 = arith.constant 64 : index
    %141 = vector.load %arg1[%c38_55, %c64_56] : memref<48x128xf32, #tpu.memory_space<vmem>>, vector<1x32xf32>
    %cst_57 = arith.constant dense<0.000000e+00> : vector<16xf32>
    %142 = vector.multi_reduction <add>, %139, %cst_57 [1] : vector<16x32xf32> to vector<16xf32>
    %143 = vector.shape_cast %142 : vector<16xf32> to vector<16x1xf32>
    %cst_58 = arith.constant 3.200000e+01 : f32
    %144 = vector.broadcast %cst_58 : f32 to vector<16x1xf32>
    %145 = arith.divf %143, %144 : vector<16x1xf32>
    %146 = arith.mulf %139, %139 : vector<16x32xf32>
    %cst_59 = arith.constant dense<0.000000e+00> : vector<16xf32>
    %147 = vector.multi_reduction <add>, %146, %cst_59 [1] : vector<16x32xf32> to vector<16xf32>
    %148 = vector.shape_cast %147 : vector<16xf32> to vector<16x1xf32>
    %cst_60 = arith.constant 3.200000e+01 : f32
    %149 = vector.broadcast %cst_60 : f32 to vector<16x1xf32>
    %150 = arith.divf %148, %149 : vector<16x1xf32>
    %151 = vector.broadcast %145 : vector<16x1xf32> to vector<16x32xf32>
    %152 = arith.subf %139, %151 : vector<16x32xf32>
    %153 = arith.mulf %145, %145 : vector<16x1xf32>
    %154 = arith.subf %150, %153 : vector<16x1xf32>
    %cst_61 = arith.constant 9.99999974E-6 : f32
    %155 = vector.broadcast %cst_61 : f32 to vector<16x1xf32>
    %156 = arith.addf %154, %155 : vector<16x1xf32>
    %157 = math.rsqrt %156 : vector<16x1xf32>
    %158 = vector.broadcast %157 : vector<16x1xf32> to vector<16x32xf32>
    %159 = arith.mulf %152, %158 : vector<16x32xf32>
    %160 = vector.broadcast %140 : vector<1x32xf32> to vector<16x32xf32>
    %161 = arith.mulf %159, %160 : vector<16x32xf32>
    %162 = vector.broadcast %141 : vector<1x32xf32> to vector<16x32xf32>
    %163 = arith.addf %161, %162 : vector<16x32xf32>
    %164 = arith.truncf %163 : vector<16x32xf32> to vector<16x32xbf16>
    %c96_62 = arith.constant 96 : index
    %c0_63 = arith.constant 0 : index
    %165 = vector.load %arg2[%c96_62, %c0_63] : memref<656x128xbf16, #tpu.memory_space<vmem>>, vector<32x128xbf16>
    %cst_64 = arith.constant dense<0.000000e+00> : vector<16x128xf32>
    %166 = tpu.matmul %164, %165, %cst_64 {dimension_numbers = #tpu.dot_dimension_numbers<[1], [0], [0], [1], [0, 0, 1, 1], [], []>} : vector<16x32xbf16>, vector<32x128xbf16>, vector<16x128xf32> -> vector<16x128xf32>
    %c37 = arith.constant 37 : index
    %c0_65 = arith.constant 0 : index
    %167 = vector.load %arg1[%c37, %c0_65] : memref<48x128xf32, #tpu.memory_space<vmem>>, vector<1x128xf32>
    %168 = vector.broadcast %167 : vector<1x128xf32> to vector<16x128xf32>
    %169 = arith.addf %166, %168 : vector<16x128xf32>
    %cst_66 = arith.constant 0.000000e+00 : f32
    %170 = vector.broadcast %cst_66 : f32 to vector<16x128xf32>
    %171 = arith.maximumf %169, %170 : vector<16x128xf32>
    %172 = arith.truncf %171 : vector<16x128xf32> to vector<16x128xbf16>
    %c256 = arith.constant 256 : index
    %c0_67 = arith.constant 0 : index
    %173 = vector.load %arg2[%c256, %c0_67] : memref<656x128xbf16, #tpu.memory_space<vmem>>, vector<128x32xbf16>
    %cst_68 = arith.constant dense<0.000000e+00> : vector<16x32xf32>
    %174 = tpu.matmul %172, %173, %cst_68 {dimension_numbers = #tpu.dot_dimension_numbers<[1], [0], [0], [1], [0, 0, 1, 1], [], []>} : vector<16x128xbf16>, vector<128x32xbf16>, vector<16x32xf32> -> vector<16x32xf32>
    %c38_69 = arith.constant 38 : index
    %c96_70 = arith.constant 96 : index
    %175 = vector.load %arg1[%c38_69, %c96_70] : memref<48x128xf32, #tpu.memory_space<vmem>>, vector<1x32xf32>
    %176 = vector.broadcast %175 : vector<1x32xf32> to vector<16x32xf32>
    %177 = arith.addf %174, %176 : vector<16x32xf32>
    %178 = arith.addf %163, %177 : vector<16x32xf32>
    %c39 = arith.constant 39 : index
    %c0_71 = arith.constant 0 : index
    %179 = vector.load %arg1[%c39, %c0_71] : memref<48x128xf32, #tpu.memory_space<vmem>>, vector<1x32xf32>
    %c39_72 = arith.constant 39 : index
    %c32_73 = arith.constant 32 : index
    %180 = vector.load %arg1[%c39_72, %c32_73] : memref<48x128xf32, #tpu.memory_space<vmem>>, vector<1x32xf32>
    %cst_74 = arith.constant dense<0.000000e+00> : vector<16xf32>
    %181 = vector.multi_reduction <add>, %178, %cst_74 [1] : vector<16x32xf32> to vector<16xf32>
    %182 = vector.shape_cast %181 : vector<16xf32> to vector<16x1xf32>
    %cst_75 = arith.constant 3.200000e+01 : f32
    %183 = vector.broadcast %cst_75 : f32 to vector<16x1xf32>
    %184 = arith.divf %182, %183 : vector<16x1xf32>
    %185 = arith.mulf %178, %178 : vector<16x32xf32>
    %cst_76 = arith.constant dense<0.000000e+00> : vector<16xf32>
    %186 = vector.multi_reduction <add>, %185, %cst_76 [1] : vector<16x32xf32> to vector<16xf32>
    %187 = vector.shape_cast %186 : vector<16xf32> to vector<16x1xf32>
    %cst_77 = arith.constant 3.200000e+01 : f32
    %188 = vector.broadcast %cst_77 : f32 to vector<16x1xf32>
    %189 = arith.divf %187, %188 : vector<16x1xf32>
    %190 = vector.broadcast %184 : vector<16x1xf32> to vector<16x32xf32>
    %191 = arith.subf %178, %190 : vector<16x32xf32>
    %192 = arith.mulf %184, %184 : vector<16x1xf32>
    %193 = arith.subf %189, %192 : vector<16x1xf32>
    %cst_78 = arith.constant 9.99999974E-6 : f32
    %194 = vector.broadcast %cst_78 : f32 to vector<16x1xf32>
    %195 = arith.addf %193, %194 : vector<16x1xf32>
    %196 = math.rsqrt %195 : vector<16x1xf32>
    %197 = vector.broadcast %196 : vector<16x1xf32> to vector<16x32xf32>
    %198 = arith.mulf %191, %197 : vector<16x32xf32>
    %199 = vector.broadcast %179 : vector<1x32xf32> to vector<16x32xf32>
    %200 = arith.mulf %198, %199 : vector<16x32xf32>
    %201 = vector.broadcast %180 : vector<1x32xf32> to vector<16x32xf32>
    %202 = arith.addf %200, %201 : vector<16x32xf32>
    %c640 = arith.constant 640 : index
    %c0_79 = arith.constant 0 : index
    %203 = vector.load %arg2[%c640, %c0_79] : memref<656x128xbf16, #tpu.memory_space<vmem>>, vector<2x16xbf16>
    %204 = arith.truncf %202 : vector<16x32xf32> to vector<16x32xbf16>
    %cst_80 = arith.constant dense<0.000000e+00> : vector<2x32xf32>
    %205 = tpu.matmul %203, %204, %cst_80 {dimension_numbers = #tpu.dot_dimension_numbers<[1], [0], [0], [1], [0, 0, 1, 1], [], []>} : vector<2x16xbf16>, vector<16x32xbf16>, vector<2x32xf32> -> vector<2x32xf32>
    %206 = arith.truncf %205 : vector<2x32xf32> to vector<2x32xbf16>
    %c480 = arith.constant 480 : index
    %c0_81 = arith.constant 0 : index
    %207 = vector.load %arg2[%c480, %c0_81] : memref<656x128xbf16, #tpu.memory_space<vmem>>, vector<32x8xbf16>
    %cst_82 = arith.constant dense<0.000000e+00> : vector<2x8xf32>
    %208 = tpu.matmul %206, %207, %cst_82 {dimension_numbers = #tpu.dot_dimension_numbers<[1], [0], [0], [1], [0, 0, 1, 1], [], []>} : vector<2x32xbf16>, vector<32x8xbf16>, vector<2x8xf32> -> vector<2x8xf32>
    %c40 = arith.constant 40 : index
    %c0_83 = arith.constant 0 : index
    %209 = vector.load %arg1[%c40, %c0_83] : memref<48x128xf32, #tpu.memory_space<vmem>>, vector<1x8xf32>
    %210 = vector.broadcast %209 : vector<1x8xf32> to vector<2x8xf32>
    %211 = arith.addf %208, %210 : vector<2x8xf32>
    %c0_84 = arith.constant 0 : index
    %c0_85 = arith.constant 0 : index
    %212 = vector.load %arg3[%c0_84, %c0_85] : memref<2x8xf32, #tpu.memory_space<vmem>>, vector<2x8xf32>
    tpu.vector_store %arg3[%c0_84, %c0_85], %211 {strides = array<i32>} : memref<2x8xf32, #tpu.memory_space<vmem>>, vector<2x8xf32>,
    return
  }
}

</mosaic_0001>

<llo_original>
// kernel: transformer_forward.1
$region0: #{transformer_forward.1}
  #allocation0 [shape = 'u32[]', space=smem, size = 0x4, offset = 0x4, fixed_abs, tag = 'smem constant byte address 0x4 - core index']
  #allocation1 [shape = 'u32[72,128]{1,0:T(1,128)}', space=vmem, size = 0x9000, scoped, tag = 'internal scratch']
  %s0 = inlined_call_operand.vmem [shape: f32[16,32], index: 0, kind: input, shape index: {}]
  %s1 = inlined_call_operand.hbm [shape: f32[48,128], index: 1, kind: input, shape index: {}]
  %s2 = inlined_call_operand.hbm [shape: bf16[656,128], index: 2, kind: input, shape index: {}]
  %s3 = inlined_call_operand.hbm [shape: f32[2,8], index: 3, kind: output, shape index: {}]
  %s4 = sld [smem:[#allocation0]]
  $region30: #{transformer_forward.1} parent=0
    _
  %s6 = ssub.s32 1, %s4
  %s7 = scalar_select 0, %s6, %s4
  $region1: #{transformer_forward.1} parent=0
    #allocation2 [shape = 'u8[24576]{0}', space=vmem, size = 0x6000, scoped, tag = 'input window, operand 1, single buffered']
    #allocation3 [shape = 's32[1]{0}', space=sflag, size = 0x4, scoped, tag = 'scoped memory for transformer_forward.1']
    #allocation4 [shape = 's32[1]{0}', space=sflag, size = 0x4, scoped, tag = 'scoped memory for transformer_forward.1']
    #allocation5 [shape = 'u8[167936]{0}', space=vmem, size = 0x29000, scoped, tag = 'input window, operand 2, single buffered']
    #allocation6 [shape = 's32[1]{0}', space=sflag, size = 0x4, scoped, tag = 'scoped memory for transformer_forward.1']
    #allocation7 [shape = 'u8[1024]{0}', space=vmem, size = 0x400, scoped, tag = 'output window, operand 0, single buffered']
    %8 = vsyncpa [#allocation3], 0
    %9 = vsyncpa [#allocation6], 0
    %10 = vsyncpa [#allocation4], 0
    // Predicated region
    $region2: #{transformer_forward.1} parent=1 // pred_check
      _
    $region3: #{transformer_forward.1} parent=1 // pred_check_branch
      %12 = sbr.rel (0) target = $region5
    $region4: #{transformer_forward.1} parent=1 // pred_region
      _
    $region5: #{transformer_forward.1} parent=1 // pred_fallthru
      _
    // Predicated region
    $region6: #{transformer_forward.1} parent=1 // pred_check
      _
    $region7: #{transformer_forward.1} parent=1 // pred_check_branch
      %14 = sbr.rel (0) target = $region9
    $region8: #{transformer_forward.1} parent=1 // pred_region
      %16 = vsyncadd [#allocation3], 0
      %s17 = sshll.u32 %s1, 4
      %s18 = int_to_ptr.hbm [resolvable:$true] %s17
      %s19 = sshll.u32 [#allocation2], 4
      %s20 = int_to_ptr.vmem [resolvable:$true] %s19
      %25 = dma.hbm_to_vmem [thread:$0]  %s18, 768, %s20, [#allocation3], 128, 128, 8
    $region9: #{transformer_forward.1} parent=1 // pred_fallthru
      _
    // Predicated region
    $region10: #{transformer_forward.1} parent=1 // pred_check
      _
    $region11: #{transformer_forward.1} parent=1 // pred_check_branch
      %27 = sbr.rel (0) target = $region13
    $region12: #{transformer_forward.1} parent=1 // pred_region
      %29 = vsyncadd [#allocation6], 0
      %s30 = sshll.u32 %s2, 4
      %s31 = int_to_ptr.hbm [resolvable:$true] %s30
      %s32 = sshll.u32 [#allocation5], 4
      %s33 = int_to_ptr.vmem [resolvable:$true] %s32
      %38 = dma.hbm_to_vmem [thread:$0]  %s31, 5248, %s33, [#allocation6], 64, 64, 4
    $region13: #{transformer_forward.1} parent=1 // pred_fallthru
      _
    // Predicated region
    $region14: #{transformer_forward.1} parent=1 // pred_check
      _
    $region15: #{transformer_forward.1} parent=1 // pred_check_branch
      %40 = sbr.rel (0) target = $region17
    $region16: #{transformer_forward.1} parent=1 // pred_region
      %42 = dma.done [#allocation3], 768
    $region17: #{transformer_forward.1} parent=1 // pred_fallthru
      _
    // Predicated region
    $region18: #{transformer_forward.1} parent=1 // pred_check
      _
    $region19: #{transformer_forward.1} parent=1 // pred_check_branch
      %44 = sbr.rel (0) target = $region21
    $region20: #{transformer_forward.1} parent=1 // pred_region
      %46 = dma.done [#allocation6], 5248
    $region21: #{transformer_forward.1} parent=1 // pred_fallthru
      _
    %v48 = vld [vmem:[#allocation2 + $0x10] sm:$0xff]
    %v49 = vld [vmem:[#allocation2 + $0x18] sm:$0xff]
    %v50 = vld [vmem:[#allocation5 + $0x100] sm:$0xf]
    %v51 = vld [vmem:[#allocation5 + $0x104] sm:$0xf]
    %v52 = vld [vmem:[#allocation5 + $0x108] sm:$0xf]
    %v53 = vld [vmem:[#allocation5 + $0x10c] sm:$0xf]
    %v54 = vld [vmem:[#allocation5 + $0x110] sm:$0xf]
    %v55 = vld [vmem:[#allocation5 + $0x114] sm:$0xf]
    %v56 = vld [vmem:[#allocation5 + $0x118] sm:$0xf]
    %v57 = vld [vmem:[#allocation5 + $0x11c] sm:$0xf]
    %v58 = vld [vmem:[#allocation5 + $0x120] sm:$0xf]
    %v59 = vld [vmem:[#allocation5 + $0x124] sm:$0xf]
    %v60 = vld [vmem:[#allocation5 + $0x128] sm:$0xf]
    %v61 = vld [vmem:[#allocation5 + $0x12c] sm:$0xf]
    %v62 = vld [vmem:[#allocation5 + $0x130] sm:$0xf]
    %v63 = vld [vmem:[#allocation5 + $0x134] sm:$0xf]
    %v64 = vld [vmem:[#allocation5 + $0x138] sm:$0xf]
    %v65 = vld [vmem:[#allocation5 + $0x13c] sm:$0xf]
    %v66 = vld [vmem:[%s0] sm:$0xff]
    %v67 = vld [vmem:[%s0 + $0x8] sm:$0xff]
    %v68 = vpack.c.bf16 %v67, %v66
    %v69 = vld [vmem:[#allocation5 + $0xe0] sm:$0xf]
    %v70 = vld [vmem:[#allocation5 + $0xe4] sm:$0xf]
    %v71 = vld [vmem:[#allocation5 + $0xe8] sm:$0xf]
    %v72 = vld [vmem:[#allocation5 + $0xec] sm:$0xf]
    %v73 = vld [vmem:[#allocation2] sm:$0xff]
    %v74 = vld [vmem:[#allocation2 + $0x8] sm:$0xff]
    %v79 = vunpack.c.l.b16 %v69
    %v80 = vunpack.c.l.b16 %v70
    %v81 = vunpack.c.l.b16 %v71
    %v82 = vunpack.c.l.b16 %v72
    %v83 = vpack.c.b16 %v80, %v79
    %v84 = vpack.c.b16 %v82, %v81
    %vm87 = vcmask 261120
    %v89 = vsel %vm87, %v68, 0
    %91 = vmatpush.bf16.msra.mxu0 0
    %92 = vmatpush.bf16.msra.mxu0 0
    %93 = vmatpush.bf16.msra.mxu0 0
    %94 = vmatpush.bf16.msra.mxu0 0
    %95 = vmatpush.bf16.msra.mxu0 0
    %96 = vmatpush.bf16.msra.mxu0 0
    %97 = vmatpush.bf16.msra.mxu0 %v84
    %98 = vmatpush.bf16.msra.mxu0 %v83
    %99 = vmatmul.bf16.gmra.mxu0 %v89
    %v100 = vpop.f32.mrf.mxu0
    %v101 = vadd.f32 %v73, %v100
    %v102 = vpop.f32.mrf.mxu0
    %v103 = vadd.f32 %v74, %v102
    %104 = vdwg.mxu0
    %v105 = vpack.c.bf16 %v103, %v101
    %v106 = vld [vmem:[#allocation5] sm:$0xf]
    %v107 = vld [vmem:[#allocation5 + $0x4] sm:$0xf]
    %v108 = vld [vmem:[#allocation5 + $0x8] sm:$0xf]
    %v109 = vld [vmem:[#allocation5 + $0xc] sm:$0xf]
    %v110 = vld [vmem:[#allocation2 + $0x20] sm:$0x1]
    %v111 = vperm.slane %v110, 0
    %v116 = vunpack.c.l.b16 %v106
    %v117 = vunpack.c.l.b16 %v107
    %v118 = vunpack.c.l.b16 %v108
    %v119 = vunpack.c.l.b16 %v109
    %v120 = vpack.c.b16 %v117, %v116
    %v121 = vpack.c.b16 %v119, %v118
    %v125 = vsel %vm87, %v105, 0
    %127 = vmatpush.bf16.msra.mxu0 0
    %128 = vmatpush.bf16.msra.mxu0 0
    %129 = vmatpush.bf16.msra.mxu0 0
    %130 = vmatpush.bf16.msra.mxu0 0
    %131 = vmatpush.bf16.msra.mxu0 0
    %132 = vmatpush.bf16.msra.mxu0 0
    %133 = vmatpush.bf16.msra.mxu0 %v121
    %134 = vmatpush.bf16.msra.mxu0 %v120
    %135 = vmatmul.bf16.gmra.mxu0 %v125
    %v136 = vpop.f32.mrf.mxu0
    %v137 = vadd.f32 %v111, %v136
    %v138 = vpop.f32.mrf.mxu0
    %v139 = vadd.f32 %v111, %v138
    %140 = vdwg.mxu0
    %v141 = vpack.c.bf16 %v137, %v137
    %v142 = vpack.c.bf16 %v139, %v139
    %v151 = vunpack.c.l.b16 %v50
    %v152 = vunpack.c.l.b16 %v51
    %v153 = vunpack.c.l.b16 %v52
    %v154 = vunpack.c.l.b16 %v53
    %v155 = vunpack.c.l.b16 %v54
    %v156 = vunpack.c.l.b16 %v55
    %v157 = vunpack.c.l.b16 %v56
    %v158 = vunpack.c.l.b16 %v57
    %v159 = vpack.c.b16 %v152, %v151
    %v160 = vpack.c.b16 %v154, %v153
    %v161 = vpack.c.b16 %v156, %v155
    %v162 = vpack.c.b16 %v158, %v157
    %v165 = vunpack.c.l.b16 %v141
    %v166 = vunpack.c.l.b16 %v142
    %v167 = vpack.c.b16 %v166, %v165
    %168 = vrot.lane.b32.xlu0 %v167, 96
    %v169 = vpop.permute.xlu0 %168
    %vm171 = vcmask 130048
    %v173 = vsel %vm171, %v159, 0
    %v176 = vsel %vm171, %v160, 0
    %v179 = vsel %vm171, %v161, 0
    %v182 = vsel %vm171, %v162, 0
    %184 = vmatpush.bf16.msra.mxu0 0
    %185 = vmatpush.bf16.msra.mxu0 0
    %186 = vmatpush.bf16.msra.mxu0 0
    %187 = vmatpush.bf16.msra.mxu0 0
    %188 = vmatpush.bf16.msra.mxu0 0
    %189 = vmatpush.bf16.msra.mxu0 0
    %190 = vmatpush.bf16.msra.mxu0 0
    %191 = vmatpush.bf16.msra.mxu0 %v169
    %192 = vmatmul.bf16.gmra.mxu0 %v173
    %v193 = vpop.f32.mrf.mxu0
    %v194 = vadd.f32 0.0, %v193
    %v195 = vpop.f32.mrf.mxu0
    %v196 = vadd.f32 0.0, %v195
    %197 = vmatmul.bf16.gmra.mxu0 %v176
    %v198 = vpop.f32.mrf.mxu0
    %v199 = vadd.f32 0.0, %v198
    %v200 = vpop.f32.mrf.mxu0
    %v201 = vadd.f32 0.0, %v200
    %202 = vmatmul.bf16.gmra.mxu0 %v179
    %v203 = vpop.f32.mrf.mxu0
    %v204 = vadd.f32 0.0, %v203
    %v205 = vpop.f32.mrf.mxu0
    %v206 = vadd.f32 0.0, %v205
    %207 = vmatmul.bf16.gmra.mxu0 %v182
    %v208 = vpop.f32.mrf.mxu0
    %v209 = vadd.f32 0.0, %v208
    %v210 = vpop.f32.mrf.mxu0
    %v211 = vadd.f32 0.0, %v210
    %212 = vdwg.mxu0
    %v213 = vpack.c.bf16 %v194, %v194
    %v214 = vpack.c.bf16 %v196, %v196
    %v215 = vpack.c.bf16 %v199, %v199
    %v216 = vpack.c.bf16 %v201, %v201
    %v217 = vpack.c.bf16 %v204, %v204
    %v218 = vpack.c.bf16 %v206, %v206
    %v219 = vpack.c.bf16 %v209, %v209
    %v220 = vpack.c.bf16 %v211, %v211
    %v221 = vunpack.c.l.bf16 %v213
    %v222 = vunpack.c.l.bf16 %v214
    %v223 = vunpack.c.l.bf16 %v215
    %v224 = vunpack.c.l.bf16 %v216
    %v225 = vunpack.c.l.bf16 %v217
    %v226 = vunpack.c.l.bf16 %v218
    %v227 = vunpack.c.l.bf16 %v219
    %v228 = vunpack.c.l.bf16 %v220
    %v229 = vunpack.c.l.bf16 %v58
    %v230 = vunpack.c.l.bf16 %v59
    %v231 = vunpack.c.l.bf16 %v60
    %v232 = vunpack.c.l.bf16 %v61
    %v233 = vunpack.c.l.bf16 %v62
    %v234 = vunpack.c.l.bf16 %v63
    %v235 = vunpack.c.l.bf16 %v64
    %v236 = vunpack.c.l.bf16 %v65
    %v237 = vmul.f32 %v221, %v229
    %v238 = vmul.f32 %v222, %v230
    %v239 = vmul.f32 %v223, %v231
    %v240 = vmul.f32 %v224, %v232
    %v241 = vmul.f32 %v225, %v233
    %v242 = vmul.f32 %v226, %v234
    %v243 = vmul.f32 %v227, %v235
    %v244 = vmul.f32 %v228, %v236
    %v245 = vpack.c.bf16 %v237, %v237
    %v246 = vpack.c.bf16 %v238, %v238
    %v247 = vpack.c.bf16 %v239, %v239
    %v248 = vpack.c.bf16 %v240, %v240
    %v249 = vpack.c.bf16 %v241, %v241
    %v250 = vpack.c.bf16 %v242, %v242
    %v251 = vpack.c.bf16 %v243, %v243
    %v252 = vpack.c.bf16 %v244, %v244
    %v261 = vunpack.c.l.b16 %v245
    %v262 = vunpack.c.l.b16 %v246
    %v263 = vunpack.c.l.b16 %v247
    %v264 = vunpack.c.l.b16 %v248
    %v265 = vunpack.c.l.b16 %v249
    %v266 = vunpack.c.l.b16 %v250
    %v267 = vunpack.c.l.b16 %v251
    %v268 = vunpack.c.l.b16 %v252
    %v269 = vpack.c.b16 %v262, %v261
    %v270 = vpack.c.b16 %v264, %v263
    %v271 = vpack.c.b16 %v266, %v265
    %v272 = vpack.c.b16 %v268, %v267
    %v274 = vsel %vm87, %v167, 0
    %v277 = vsel %vm87, %v269, 0
    %v280 = vsel %vm87, %v270, 0
    %v283 = vsel %vm87, %v271, 0
    %v286 = vsel %vm87, %v272, 0
    %288 = vmatpush.bf16.xpose.msra.mxu0 0
    %289 = vmatpush.bf16.xpose.msra.mxu0 0
    %290 = vmatpush.bf16.xpose.msra.mxu0 0
    %291 = vmatpush.bf16.xpose.msra.mxu0 0
    %292 = vmatpush.bf16.xpose.msra.mxu0 %v286
    %293 = vmatpush.bf16.xpose.msra.mxu0 %v283
    %294 = vmatpush.bf16.xpose.msra.mxu0 %v280
    %295 = vmatpush.bf16.xpose.msra.mxu0 %v277
    %296 = vmatmul.bf16.gmra.mxu0 %v274
    %v297 = vpop.f32.mrf.mxu0
    %v298 = vadd.f32 %v48, %v297
    %v299 = vpop.f32.mrf.mxu0
    %v300 = vadd.f32 %v49, %v299
    %301 = vdwg.mxu0
    %vm302 = vcmask 523264
    %v303 = vsel %vm302, %v298, -inf
    %304 = vmax.xlane.f32.xlu0 %v303
    %v305 = vpop.xlane.xlu0 %304
    %v306 = vsel %vm302, %v300, -inf
    %307 = vmax.xlane.f32.xlu0 %v306
    %v308 = vpop.xlane.xlu0 %307
    %v309 = vsub.f32 %v298, %v305
    %v310 = vsub.f32 %v300, %v308
    %v311 = vmul.f32 %v309, 1.442695
    %v312 = vpow.pop %v311
    %v313 = vmul.f32 %v310, 1.442695
    %v314 = vpow.pop %v313
    %v315 = vpack.c.bf16 %v314, %v312
    %316 = vrot.lane.b32.xlu0 %v269, 96
    %v317 = vpop.permute.xlu0 %316
    %318 = vrot.lane.b32.xlu0 %v270, 96
    %v319 = vpop.permute.xlu0 %318
    %320 = vrot.lane.b32.xlu0 %v271, 96
    %v321 = vpop.permute.xlu0 %320
    %322 = vrot.lane.b32.xlu0 %v272, 96
    %v323 = vpop.permute.xlu0 %322
    %v329 = vsel %vm302, %v315, 0
    %331 = vmatpush.bf16.msra.mxu0 0
    %332 = vmatpush.bf16.msra.mxu0 0
    %333 = vmatpush.bf16.msra.mxu0 0
    %334 = vmatpush.bf16.msra.mxu0 0
    %335 = vmatpush.bf16.msra.mxu0 %v323
    %336 = vmatpush.bf16.msra.mxu0 %v321
    %337 = vmatpush.bf16.msra.mxu0 %v319
    %338 = vmatpush.bf16.msra.mxu0 %v317
    %339 = vmatmul.bf16.gmra.mxu0 %v329
    %v340 = vpop.f32.mrf.mxu0
    %v341 = vadd.f32 0.0, %v340
    %v342 = vpop.f32.mrf.mxu0
    %v343 = vadd.f32 0.0, %v342
    %344 = vdwg.mxu0
    %v345 = vrcp.pop %v341
    %v346 = vrcp.pop %v343
    %349 = vrot.lane.b32.xlu0 %v345, 96
    %v350 = vpop.permute.xlu0 %349
    %351 = vrot.lane.b32.xlu0 %v346, 96
    %v352 = vpop.permute.xlu0 %351
    %v355 = vmul.f32 %v341, %v350
    %v356 = vmul.f32 %v343, %v352
    %v357 = vpack.c.bf16 %v356, %v355
    %v358 = vld [vmem:[#allocation5 + $0xc0] sm:$0xf]
    %v359 = vld [vmem:[#allocation5 + $0xc4] sm:$0xf]
    %v360 = vld [vmem:[#allocation5 + $0xc8] sm:$0xf]
    %v361 = vld [vmem:[#allocation5 + $0xcc] sm:$0xf]
    %v362 = vld [vmem:[#allocation2 + $0x22] sm:$0x1]
    %v363 = vperm.slane %v362, 0
    %v368 = vunpack.c.l.b16 %v358
    %v369 = vunpack.c.l.b16 %v359
    %v370 = vunpack.c.l.b16 %v360
    %v371 = vunpack.c.l.b16 %v361
    %v372 = vpack.c.b16 %v369, %v368
    %v373 = vpack.c.b16 %v371, %v370
    %v377 = vsel %vm87, %v357, 0
    %379 = vmatpush.bf16.msra.mxu0 0
    %380 = vmatpush.bf16.msra.mxu0 0
    %381 = vmatpush.bf16.msra.mxu0 0
    %382 = vmatpush.bf16.msra.mxu0 0
    %383 = vmatpush.bf16.msra.mxu0 0
    %384 = vmatpush.bf16.msra.mxu0 0
    %385 = vmatpush.bf16.msra.mxu0 %v373
    %386 = vmatpush.bf16.msra.mxu0 %v372
    %387 = vmatmul.bf16.gmra.mxu0 %v377
    %v388 = vpop.f32.mrf.mxu0
    %v389 = vadd.f32 %v363, %v388
    %v390 = vpop.f32.mrf.mxu0
    %v391 = vadd.f32 %v363, %v390
    %392 = vdwg.mxu0
    %v393 = vadd.f32 %v101, %v389
    %v394 = vadd.f32 %v103, %v391
    %v395 = vsel %vm87, %v393, 0.0
    %396 = vadd.xlane.f32.xlu0 %v395
    %v397 = vpop.xlane.xlu0 %396
    %v398 = vsel %vm87, %v394, 0.0
    %399 = vadd.xlane.f32.xlu0 %v398
    %v400 = vpop.xlane.xlu0 %399
    %v401 = vrcp.pop 32.0
    %v402 = vmul.f32 32.0, %v401
    %v403 = vsub.f32 1.0, %v402
    %v404 = vmul.f32 %v401, %v403
    %v405 = vadd.f32 %v401, %v404
    %vm406 = vweird.f32 %v401
    %v407 = vsel %vm406, %v401, %v405
    %v408 = vmul.f32 %v397, %v407
    %v409 = vmul.f32 %v400, %v407
    %v410 = vmul.f32 %v393, %v393
    %v411 = vmul.f32 %v394, %v394
    %v412 = vsel %vm87, %v410, 0.0
    %413 = vadd.xlane.f32.xlu0 %v412
    %v414 = vpop.xlane.xlu0 %413
    %v415 = vsel %vm87, %v411, 0.0
    %416 = vadd.xlane.f32.xlu0 %v415
    %v417 = vpop.xlane.xlu0 %416
    %v418 = vmul.f32 %v414, %v407
    %v419 = vmul.f32 %v417, %v407
    %v420 = vsub.f32 %v393, %v408
    %v421 = vsub.f32 %v394, %v409
    %v422 = vmul.f32 %v408, %v408
    %v423 = vmul.f32 %v409, %v409
    %v424 = vsub.f32 %v418, %v422
    %v425 = vsub.f32 %v419, %v423
    %v426 = vadd.f32 %v424, 1e-05
    %v427 = vadd.f32 %v425, 1e-05
    %v428 = vrsqrt.pop %v426
    %v429 = vmul.f32 %v428, %v426
    %v430 = vmul.f32 %v429, %v428
    %v431 = vmul.f32 0.5, %v430
    %v432 = vsub.f32 1.5, %v431
    %v433 = vmul.f32 %v428, %v432
    %vm434 = vweird.f32 %v426
    %vm435 = vweird.f32 %v428
    %vm436 = vmor %vm434, %vm435
    %v437 = vsel %vm436, %v428, %v433
    %v438 = vrsqrt.pop %v427
    %v439 = vmul.f32 %v438, %v427
    %v440 = vmul.f32 %v439, %v438
    %v441 = vmul.f32 0.5, %v440
    %v442 = vsub.f32 1.5, %v441
    %v443 = vmul.f32 %v438, %v442
    %vm444 = vweird.f32 %v427
    %vm445 = vweird.f32 %v438
    %vm446 = vmor %vm444, %vm445
    %v447 = vsel %vm446, %v438, %v443
    %v448 = vmul.f32 %v420, %v437
    %v449 = vmul.f32 %v421, %v447
    %451 = vrot.lane.b32.xlu0 %v363, 96
    %v452 = vpop.permute.xlu0 %451
    %v454 = vmul.f32 %v448, %v452
    %v455 = vmul.f32 %v449, %v452
    %456 = vrot.lane.b32.xlu0 %v363, 64
    %v457 = vpop.permute.xlu0 %456
    %v459 = vadd.f32 %v454, %v457
    %v460 = vadd.f32 %v455, %v457
    %v461 = vpack.c.bf16 %v460, %v459
    %v462 = vld [vmem:[#allocation5 + $0x20] sm:$0xf]
    %v463 = vld [vmem:[#allocation5 + $0x24] sm:$0xf]
    %v464 = vld [vmem:[#allocation5 + $0x28] sm:$0xf]
    %v465 = vld [vmem:[#allocation5 + $0x2c] sm:$0xf]
    %v466 = vld [vmem:[#allocation2 + $0x21] sm:$0x1]
    %v467 = vperm.slane %v466, 0
    %v472 = vunpack.c.l.b16 %v462
    %v473 = vunpack.c.l.b16 %v463
    %v474 = vunpack.c.l.b16 %v464
    %v475 = vunpack.c.l.b16 %v465
    %v476 = vpack.c.b16 %v473, %v472
    %v477 = vpack.c.b16 %v475, %v474
    %v481 = vsel %vm87, %v461, 0
    %483 = vmatpush.bf16.msra.mxu0 0
    %484 = vmatpush.bf16.msra.mxu0 0
    %485 = vmatpush.bf16.msra.mxu0 0
    %486 = vmatpush.bf16.msra.mxu0 0
    %487 = vmatpush.bf16.msra.mxu0 0
    %488 = vmatpush.bf16.msra.mxu0 0
    %489 = vmatpush.bf16.msra.mxu0 %v477
    %490 = vmatpush.bf16.msra.mxu0 %v476
    %491 = vmatmul.bf16.gmra.mxu0 %v481
    %v492 = vpop.f32.mrf.mxu0
    %v493 = vadd.f32 %v467, %v492
    %v494 = vpop.f32.mrf.mxu0
    %v495 = vadd.f32 %v467, %v494
    %496 = vdwg.mxu0
    %v497 = vmax.f32 %v493, 0.0
    %v498 = vmax.f32 %v495, 0.0
    %v499 = vpack.c.bf16 %v498, %v497
    %v500 = vld [vmem:[#allocation5 + $0x40] sm:$0xf]
    %v501 = vld [vmem:[#allocation5 + $0x44] sm:$0xf]
    %v502 = vld [vmem:[#allocation5 + $0x48] sm:$0xf]
    %v503 = vld [vmem:[#allocation5 + $0x4c] sm:$0xf]
    %v504 = vld [vmem:[#allocation5 + $0x50] sm:$0xf]
    %v505 = vld [vmem:[#allocation5 + $0x54] sm:$0xf]
    %v506 = vld [vmem:[#allocation5 + $0x58] sm:$0xf]
    %v507 = vld [vmem:[#allocation5 + $0x5c] sm:$0xf]
    %v508 = vld [vmem:[#allocation5 + $0x60] sm:$0xf]
    %v509 = vld [vmem:[#allocation5 + $0x64] sm:$0xf]
    %v510 = vld [vmem:[#allocation5 + $0x68] sm:$0xf]
    %v511 = vld [vmem:[#allocation5 + $0x6c] sm:$0xf]
    %v512 = vld [vmem:[#allocation5 + $0x70] sm:$0xf]
    %v513 = vld [vmem:[#allocation5 + $0x74] sm:$0xf]
    %v514 = vld [vmem:[#allocation5 + $0x78] sm:$0xf]
    %v515 = vld [vmem:[#allocation5 + $0x7c] sm:$0xf]
    %v532 = vunpack.c.l.b16 %v500
    %v533 = vunpack.c.l.b16 %v501
    %v534 = vunpack.c.l.b16 %v502
    %v535 = vunpack.c.l.b16 %v503
    %v536 = vunpack.c.l.b16 %v504
    %v537 = vunpack.c.l.b16 %v505
    %v538 = vunpack.c.l.b16 %v506
    %v539 = vunpack.c.l.b16 %v507
    %v540 = vunpack.c.l.b16 %v508
    %v541 = vunpack.c.l.b16 %v509
    %v542 = vunpack.c.l.b16 %v510
    %v543 = vunpack.c.l.b16 %v511
    %v544 = vunpack.c.l.b16 %v512
    %v545 = vunpack.c.l.b16 %v513
    %v546 = vunpack.c.l.b16 %v514
    %v547 = vunpack.c.l.b16 %v515
    %v548 = vpack.c.b16 %v533, %v532
    %v549 = vpack.c.b16 %v535, %v534
    %v550 = vpack.c.b16 %v537, %v536
    %v551 = vpack.c.b16 %v539, %v538
    %v552 = vpack.c.b16 %v541, %v540
    %v553 = vpack.c.b16 %v543, %v542
    %v554 = vpack.c.b16 %v545, %v544
    %v555 = vpack.c.b16 %v547, %v546
    %564 = vrot.lane.b32.xlu0 %v363, 32
    %v565 = vpop.permute.xlu0 %564
    %567 = vmatpush.bf16.msra.mxu0 %v555
    %568 = vmatpush.bf16.msra.mxu0 %v554
    %569 = vmatpush.bf16.msra.mxu0 %v553
    %570 = vmatpush.bf16.msra.mxu0 %v552
    %571 = vmatpush.bf16.msra.mxu0 %v551
    %572 = vmatpush.bf16.msra.mxu0 %v550
    %573 = vmatpush.bf16.msra.mxu0 %v549
    %574 = vmatpush.bf16.msra.mxu0 %v548
    %575 = vmatmul.bf16.gmra.mxu0 %v499
    %v576 = vpop.f32.mrf.mxu0
    %v577 = vadd.f32 %v565, %v576
    %v578 = vpop.f32.mrf.mxu0
    %v579 = vadd.f32 %v565, %v578
    %580 = vdwg.mxu0
    %v581 = vadd.f32 %v459, %v577
    %v582 = vadd.f32 %v460, %v579
    %v583 = vld [vmem:[#allocation2 + $0x23] sm:$0x1]
    %v584 = vsel %vm87, %v581, 0.0
    %585 = vadd.xlane.f32.xlu0 %v584
    %v586 = vpop.xlane.xlu0 %585
    %v587 = vsel %vm87, %v582, 0.0
    %588 = vadd.xlane.f32.xlu0 %v587
    %v589 = vpop.xlane.xlu0 %588
    %v590 = vmul.f32 %v586, %v407
    %v591 = vmul.f32 %v589, %v407
    %v592 = vmul.f32 %v581, %v581
    %v593 = vmul.f32 %v582, %v582
    %v594 = vsel %vm87, %v592, 0.0
    %595 = vadd.xlane.f32.xlu0 %v594
    %v596 = vpop.xlane.xlu0 %595
    %v597 = vsel %vm87, %v593, 0.0
    %598 = vadd.xlane.f32.xlu0 %v597
    %v599 = vpop.xlane.xlu0 %598
    %v600 = vmul.f32 %v596, %v407
    %v601 = vmul.f32 %v599, %v407
    %v602 = vsub.f32 %v581, %v590
    %v603 = vsub.f32 %v582, %v591
    %v604 = vmul.f32 %v590, %v590
    %v605 = vmul.f32 %v591, %v591
    %v606 = vsub.f32 %v600, %v604
    %v607 = vsub.f32 %v601, %v605
    %v608 = vadd.f32 %v606, 1e-05
    %v609 = vadd.f32 %v607, 1e-05
    %v610 = vrsqrt.pop %v608
    %v611 = vmul.f32 %v610, %v608
    %v612 = vmul.f32 %v611, %v610
    %v613 = vmul.f32 0.5, %v612
    %v614 = vsub.f32 1.5, %v613
    %v615 = vmul.f32 %v610, %v614
    %vm616 = vweird.f32 %v608
    %vm617 = vweird.f32 %v610
    %vm618 = vmor %vm616, %vm617
    %v619 = vsel %vm618, %v610, %v615
    %v620 = vrsqrt.pop %v609
    %v621 = vmul.f32 %v620, %v609
    %v622 = vmul.f32 %v621, %v620
    %v623 = vmul.f32 0.5, %v622
    %v624 = vsub.f32 1.5, %v623
    %v625 = vmul.f32 %v620, %v624
    %vm626 = vweird.f32 %v609
    %vm627 = vweird.f32 %v620
    %vm628 = vmor %vm626, %vm627
    %v629 = vsel %vm628, %v620, %v625
    %v630 = vmul.f32 %v602, %v619
    %v631 = vmul.f32 %v603, %v629
    %v632 = vperm.slane %v583, 0
    %v633 = vmul.f32 %v630, %v632
    %v634 = vmul.f32 %v631, %v632
    %636 = vrot.lane.b32.xlu0 %v632, 96
    %v637 = vpop.permute.xlu0 %636
    %v639 = vadd.f32 %v633, %v637
    %v640 = vadd.f32 %v634, %v637
    %v641 = vpack.c.bf16 %v640, %v639
    %v642 = vld [vmem:[#allocation5 + $0x10] sm:$0xf]
    %v643 = vld [vmem:[#allocation5 + $0x14] sm:$0xf]
    %v644 = vld [vmem:[#allocation5 + $0x18] sm:$0xf]
    %v645 = vld [vmem:[#allocation5 + $0x1c] sm:$0xf]
    %v646 = vld [vmem:[#allocation2 + $0x24] sm:$0x1]
    %v647 = vperm.slane %v646, 0
    %v652 = vunpack.c.l.b16 %v642
    %v653 = vunpack.c.l.b16 %v643
    %v654 = vunpack.c.l.b16 %v644
    %v655 = vunpack.c.l.b16 %v645
    %v656 = vpack.c.b16 %v653, %v652
    %v657 = vpack.c.b16 %v655, %v654
    %v661 = vsel %vm87, %v641, 0
    %663 = vmatpush.bf16.msra.mxu0 0
    %664 = vmatpush.bf16.msra.mxu0 0
    %665 = vmatpush.bf16.msra.mxu0 0
    %666 = vmatpush.bf16.msra.mxu0 0
    %667 = vmatpush.bf16.msra.mxu0 0
    %668 = vmatpush.bf16.msra.mxu0 0
    %669 = vmatpush.bf16.msra.mxu0 %v657
    %670 = vmatpush.bf16.msra.mxu0 %v656
    %671 = vmatmul.bf16.gmra.mxu0 %v661
    %v672 = vpop.f32.mrf.mxu0
    %v673 = vadd.f32 %v647, %v672
    %v674 = vpop.f32.mrf.mxu0
    %v675 = vadd.f32 %v647, %v674
    %676 = vdwg.mxu0
    %v677 = vpack.c.bf16 %v673, %v673
    %v678 = vpack.c.bf16 %v675, %v675
    %v681 = vunpack.c.l.b16 %v677
    %v682 = vunpack.c.l.b16 %v678
    %v683 = vpack.c.b16 %v682, %v681
    %684 = vrot.lane.b32.xlu0 %v683, 96
    %v685 = vpop.permute.xlu0 %684
    %687 = vmatpush.bf16.msra.mxu0 0
    %688 = vmatpush.bf16.msra.mxu0 0
    %689 = vmatpush.bf16.msra.mxu0 0
    %690 = vmatpush.bf16.msra.mxu0 0
    %691 = vmatpush.bf16.msra.mxu0 0
    %692 = vmatpush.bf16.msra.mxu0 0
    %693 = vmatpush.bf16.msra.mxu0 0
    %694 = vmatpush.bf16.msra.mxu0 %v685
    %695 = vmatmul.bf16.gmra.mxu0 %v173
    %v696 = vpop.f32.mrf.mxu0
    %v697 = vadd.f32 0.0, %v696
    %v698 = vpop.f32.mrf.mxu0
    %v699 = vadd.f32 0.0, %v698
    %700 = vmatmul.bf16.gmra.mxu0 %v176
    %v701 = vpop.f32.mrf.mxu0
    %v702 = vadd.f32 0.0, %v701
    %v703 = vpop.f32.mrf.mxu0
    %v704 = vadd.f32 0.0, %v703
    %705 = vmatmul.bf16.gmra.mxu0 %v179
    %v706 = vpop.f32.mrf.mxu0
    %v707 = vadd.f32 0.0, %v706
    %v708 = vpop.f32.mrf.mxu0
    %v709 = vadd.f32 0.0, %v708
    %710 = vmatmul.bf16.gmra.mxu0 %v182
    %v711 = vpop.f32.mrf.mxu0
    %v712 = vadd.f32 0.0, %v711
    %v713 = vpop.f32.mrf.mxu0
    %v714 = vadd.f32 0.0, %v713
    %715 = vdwg.mxu0
    %v716 = vpack.c.bf16 %v697, %v697
    %v717 = vpack.c.bf16 %v699, %v699
    %v718 = vpack.c.bf16 %v702, %v702
    %v719 = vpack.c.bf16 %v704, %v704
    %v720 = vpack.c.bf16 %v707, %v707
    %v721 = vpack.c.bf16 %v709, %v709
    %v722 = vpack.c.bf16 %v712, %v712
    %v723 = vpack.c.bf16 %v714, %v714
    %v724 = vunpack.c.l.bf16 %v716
    %v725 = vunpack.c.l.bf16 %v717
    %v726 = vunpack.c.l.bf16 %v718
    %v727 = vunpack.c.l.bf16 %v719
    %v728 = vunpack.c.l.bf16 %v720
    %v729 = vunpack.c.l.bf16 %v721
    %v730 = vunpack.c.l.bf16 %v722
    %v731 = vunpack.c.l.bf16 %v723
    %v732 = vmul.f32 %v724, %v229
    %v733 = vmul.f32 %v725, %v230
    %v734 = vmul.f32 %v726, %v231
    %v735 = vmul.f32 %v727, %v232
    %v736 = vmul.f32 %v728, %v233
    %v737 = vmul.f32 %v729, %v234
    %v738 = vmul.f32 %v730, %v235
    %v739 = vmul.f32 %v731, %v236
    %v740 = vpack.c.bf16 %v732, %v732
    %v741 = vpack.c.bf16 %v733, %v733
    %v742 = vpack.c.bf16 %v734, %v734
    %v743 = vpack.c.bf16 %v735, %v735
    %v744 = vpack.c.bf16 %v736, %v736
    %v745 = vpack.c.bf16 %v737, %v737
    %v746 = vpack.c.bf16 %v738, %v738
    %v747 = vpack.c.bf16 %v739, %v739
    %v756 = vunpack.c.l.b16 %v740
    %v757 = vunpack.c.l.b16 %v741
    %v758 = vunpack.c.l.b16 %v742
    %v759 = vunpack.c.l.b16 %v743
    %v760 = vunpack.c.l.b16 %v744
    %v761 = vunpack.c.l.b16 %v745
    %v762 = vunpack.c.l.b16 %v746
    %v763 = vunpack.c.l.b16 %v747
    %v764 = vpack.c.b16 %v757, %v756
    %v765 = vpack.c.b16 %v759, %v758
    %v766 = vpack.c.b16 %v761, %v760
    %v767 = vpack.c.b16 %v763, %v762
    %v769 = vsel %vm87, %v683, 0
    %v772 = vsel %vm87, %v764, 0
    %v775 = vsel %vm87, %v765, 0
    %v778 = vsel %vm87, %v766, 0
    %v781 = vsel %vm87, %v767, 0
    %783 = vmatpush.bf16.xpose.msra.mxu0 0
    %784 = vmatpush.bf16.xpose.msra.mxu0 0
    %785 = vmatpush.bf16.xpose.msra.mxu0 0
    %786 = vmatpush.bf16.xpose.msra.mxu0 0
    %787 = vmatpush.bf16.xpose.msra.mxu0 %v781
    %788 = vmatpush.bf16.xpose.msra.mxu0 %v778
    %789 = vmatpush.bf16.xpose.msra.mxu0 %v775
    %790 = vmatpush.bf16.xpose.msra.mxu0 %v772
    %791 = vmatmul.bf16.gmra.mxu0 %v769
    %v792 = vpop.f32.mrf.mxu0
    %v793 = vadd.f32 %v48, %v792
    %v794 = vpop.f32.mrf.mxu0
    %v795 = vadd.f32 %v49, %v794
    %796 = vdwg.mxu0
    %v797 = vsel %vm302, %v793, -inf
    %798 = vmax.xlane.f32.xlu0 %v797
    %v799 = vpop.xlane.xlu0 %798
    %v800 = vsel %vm302, %v795, -inf
    %801 = vmax.xlane.f32.xlu0 %v800
    %v802 = vpop.xlane.xlu0 %801
    %v803 = vsub.f32 %v793, %v799
    %v804 = vsub.f32 %v795, %v802
    %v805 = vmul.f32 %v803, 1.442695
    %v806 = vpow.pop %v805
    %v807 = vmul.f32 %v804, 1.442695
    %v808 = vpow.pop %v807
    %v809 = vpack.c.bf16 %v808, %v806
    %810 = vrot.lane.b32.xlu0 %v764, 96
    %v811 = vpop.permute.xlu0 %810
    %812 = vrot.lane.b32.xlu0 %v765, 96
    %v813 = vpop.permute.xlu0 %812
    %814 = vrot.lane.b32.xlu0 %v766, 96
    %v815 = vpop.permute.xlu0 %814
    %816 = vrot.lane.b32.xlu0 %v767, 96
    %v817 = vpop.permute.xlu0 %816
    %v823 = vsel %vm302, %v809, 0
    %825 = vmatpush.bf16.msra.mxu0 0
    %826 = vmatpush.bf16.msra.mxu0 0
    %827 = vmatpush.bf16.msra.mxu0 0
    %828 = vmatpush.bf16.msra.mxu0 0
    %829 = vmatpush.bf16.msra.mxu0 %v817
    %830 = vmatpush.bf16.msra.mxu0 %v815
    %831 = vmatpush.bf16.msra.mxu0 %v813
    %832 = vmatpush.bf16.msra.mxu0 %v811
    %833 = vmatmul.bf16.gmra.mxu0 %v823
    %v834 = vpop.f32.mrf.mxu0
    %v835 = vadd.f32 0.0, %v834
    %v836 = vpop.f32.mrf.mxu0
    %v837 = vadd.f32 0.0, %v836
    %838 = vdwg.mxu0
    %v839 = vrcp.pop %v835
    %v840 = vrcp.pop %v837
    %843 = vrot.lane.b32.xlu0 %v839, 96
    %v844 = vpop.permute.xlu0 %843
    %845 = vrot.lane.b32.xlu0 %v840, 96
    %v846 = vpop.permute.xlu0 %845
    %v849 = vmul.f32 %v835, %v844
    %v850 = vmul.f32 %v837, %v846
    %v851 = vpack.c.bf16 %v850, %v849
    %v852 = vld [vmem:[#allocation5 + $0xd0] sm:$0xf]
    %v853 = vld [vmem:[#allocation5 + $0xd4] sm:$0xf]
    %v854 = vld [vmem:[#allocation5 + $0xd8] sm:$0xf]
    %v855 = vld [vmem:[#allocation5 + $0xdc] sm:$0xf]
    %v856 = vld [vmem:[#allocation2 + $0x26] sm:$0x1]
    %v857 = vperm.slane %v856, 0
    %v862 = vunpack.c.l.b16 %v852
    %v863 = vunpack.c.l.b16 %v853
    %v864 = vunpack.c.l.b16 %v854
    %v865 = vunpack.c.l.b16 %v855
    %v866 = vpack.c.b16 %v863, %v862
    %v867 = vpack.c.b16 %v865, %v864
    %v871 = vsel %vm87, %v851, 0
    %873 = vmatpush.bf16.msra.mxu0 0
    %874 = vmatpush.bf16.msra.mxu0 0
    %875 = vmatpush.bf16.msra.mxu0 0
    %876 = vmatpush.bf16.msra.mxu0 0
    %877 = vmatpush.bf16.msra.mxu0 0
    %878 = vmatpush.bf16.msra.mxu0 0
    %879 = vmatpush.bf16.msra.mxu0 %v867
    %880 = vmatpush.bf16.msra.mxu0 %v866
    %881 = vmatmul.bf16.gmra.mxu0 %v871
    %v882 = vpop.f32.mrf.mxu0
    %v883 = vadd.f32 %v857, %v882
    %v884 = vpop.f32.mrf.mxu0
    %v885 = vadd.f32 %v857, %v884
    %886 = vdwg.mxu0
    %v887 = vadd.f32 %v639, %v883
    %v888 = vadd.f32 %v640, %v885
    %v889 = vsel %vm87, %v887, 0.0
    %890 = vadd.xlane.f32.xlu0 %v889
    %v891 = vpop.xlane.xlu0 %890
    %v892 = vsel %vm87, %v888, 0.0
    %893 = vadd.xlane.f32.xlu0 %v892
    %v894 = vpop.xlane.xlu0 %893
    %v895 = vmul.f32 %v891, %v407
    %v896 = vmul.f32 %v894, %v407
    %v897 = vmul.f32 %v887, %v887
    %v898 = vmul.f32 %v888, %v888
    %v899 = vsel %vm87, %v897, 0.0
    %900 = vadd.xlane.f32.xlu0 %v899
    %v901 = vpop.xlane.xlu0 %900
    %v902 = vsel %vm87, %v898, 0.0
    %903 = vadd.xlane.f32.xlu0 %v902
    %v904 = vpop.xlane.xlu0 %903
    %v905 = vmul.f32 %v901, %v407
    %v906 = vmul.f32 %v904, %v407
    %v907 = vsub.f32 %v887, %v895
    %v908 = vsub.f32 %v888, %v896
    %v909 = vmul.f32 %v895, %v895
    %v910 = vmul.f32 %v896, %v896
    %v911 = vsub.f32 %v905, %v909
    %v912 = vsub.f32 %v906, %v910
    %v913 = vadd.f32 %v911, 1e-05
    %v914 = vadd.f32 %v912, 1e-05
    %v915 = vrsqrt.pop %v913
    %v916 = vmul.f32 %v915, %v913
    %v917 = vmul.f32 %v916, %v915
    %v918 = vmul.f32 0.5, %v917
    %v919 = vsub.f32 1.5, %v918
    %v920 = vmul.f32 %v915, %v919
    %vm921 = vweird.f32 %v913
    %vm922 = vweird.f32 %v915
    %vm923 = vmor %vm921, %vm922
    %v924 = vsel %vm923, %v915, %v920
    %v925 = vrsqrt.pop %v914
    %v926 = vmul.f32 %v925, %v914
    %v927 = vmul.f32 %v926, %v925
    %v928 = vmul.f32 0.5, %v927
    %v929 = vsub.f32 1.5, %v928
    %v930 = vmul.f32 %v925, %v929
    %vm931 = vweird.f32 %v914
    %vm932 = vweird.f32 %v925
    %vm933 = vmor %vm931, %vm932
    %v934 = vsel %vm933, %v925, %v930
    %v935 = vmul.f32 %v907, %v924
    %v936 = vmul.f32 %v908, %v934
    %938 = vrot.lane.b32.xlu0 %v857, 96
    %v939 = vpop.permute.xlu0 %938
    %v941 = vmul.f32 %v935, %v939
    %v942 = vmul.f32 %v936, %v939
    %943 = vrot.lane.b32.xlu0 %v857, 64
    %v944 = vpop.permute.xlu0 %943
    %v946 = vadd.f32 %v941, %v944
    %v947 = vadd.f32 %v942, %v944
    %v948 = vpack.c.bf16 %v947, %v946
    %v949 = vld [vmem:[#allocation5 + $0x30] sm:$0xf]
    %v950 = vld [vmem:[#allocation5 + $0x34] sm:$0xf]
    %v951 = vld [vmem:[#allocation5 + $0x38] sm:$0xf]
    %v952 = vld [vmem:[#allocation5 + $0x3c] sm:$0xf]
    %v953 = vld [vmem:[#allocation2 + $0x25] sm:$0x1]
    %v954 = vperm.slane %v953, 0
    %v959 = vunpack.c.l.b16 %v949
    %v960 = vunpack.c.l.b16 %v950
    %v961 = vunpack.c.l.b16 %v951
    %v962 = vunpack.c.l.b16 %v952
    %v963 = vpack.c.b16 %v960, %v959
    %v964 = vpack.c.b16 %v962, %v961
    %v968 = vsel %vm87, %v948, 0
    %970 = vmatpush.bf16.msra.mxu0 0
    %971 = vmatpush.bf16.msra.mxu0 0
    %972 = vmatpush.bf16.msra.mxu0 0
    %973 = vmatpush.bf16.msra.mxu0 0
    %974 = vmatpush.bf16.msra.mxu0 0
    %975 = vmatpush.bf16.msra.mxu0 0
    %976 = vmatpush.bf16.msra.mxu0 %v964
    %977 = vmatpush.bf16.msra.mxu0 %v963
    %978 = vmatmul.bf16.gmra.mxu0 %v968
    %v979 = vpop.f32.mrf.mxu0
    %v980 = vadd.f32 %v954, %v979
    %v981 = vpop.f32.mrf.mxu0
    %v982 = vadd.f32 %v954, %v981
    %983 = vdwg.mxu0
    %v984 = vmax.f32 %v980, 0.0
    %v985 = vmax.f32 %v982, 0.0
    %v986 = vpack.c.bf16 %v985, %v984
    %v987 = vld [vmem:[#allocation5 + $0x80] sm:$0xf]
    %v988 = vld [vmem:[#allocation5 + $0x84] sm:$0xf]
    %v989 = vld [vmem:[#allocation5 + $0x88] sm:$0xf]
    %v990 = vld [vmem:[#allocation5 + $0x8c] sm:$0xf]
    %v991 = vld [vmem:[#allocation5 + $0x90] sm:$0xf]
    %v992 = vld [vmem:[#allocation5 + $0x94] sm:$0xf]
    %v993 = vld [vmem:[#allocation5 + $0x98] sm:$0xf]
    %v994 = vld [vmem:[#allocation5 + $0x9c] sm:$0xf]
    %v995 = vld [vmem:[#allocation5 + $0xa0] sm:$0xf]
    %v996 = vld [vmem:[#allocation5 + $0xa4] sm:$0xf]
    %v997 = vld [vmem:[#allocation5 + $0xa8] sm:$0xf]
    %v998 = vld [vmem:[#allocation5 + $0xac] sm:$0xf]
    %v999 = vld [vmem:[#allocation5 + $0xb0] sm:$0xf]
    %v1000 = vld [vmem:[#allocation5 + $0xb4] sm:$0xf]
    %v1001 = vld [vmem:[#allocation5 + $0xb8] sm:$0xf]
    %v1002 = vld [vmem:[#allocation5 + $0xbc] sm:$0xf]
    %v1019 = vunpack.c.l.b16 %v987
    %v1020 = vunpack.c.l.b16 %v988
    %v1021 = vunpack.c.l.b16 %v989
    %v1022 = vunpack.c.l.b16 %v990
    %v1023 = vunpack.c.l.b16 %v991
    %v1024 = vunpack.c.l.b16 %v992
    %v1025 = vunpack.c.l.b16 %v993
    %v1026 = vunpack.c.l.b16 %v994
    %v1027 = vunpack.c.l.b16 %v995
    %v1028 = vunpack.c.l.b16 %v996
    %v1029 = vunpack.c.l.b16 %v997
    %v1030 = vunpack.c.l.b16 %v998
    %v1031 = vunpack.c.l.b16 %v999
    %v1032 = vunpack.c.l.b16 %v1000
    %v1033 = vunpack.c.l.b16 %v1001
    %v1034 = vunpack.c.l.b16 %v1002
    %v1035 = vpack.c.b16 %v1020, %v1019
    %v1036 = vpack.c.b16 %v1022, %v1021
    %v1037 = vpack.c.b16 %v1024, %v1023
    %v1038 = vpack.c.b16 %v1026, %v1025
    %v1039 = vpack.c.b16 %v1028, %v1027
    %v1040 = vpack.c.b16 %v1030, %v1029
    %v1041 = vpack.c.b16 %v1032, %v1031
    %v1042 = vpack.c.b16 %v1034, %v1033
    %1051 = vrot.lane.b32.xlu0 %v857, 32
    %v1052 = vpop.permute.xlu0 %1051
    %1054 = vmatpush.bf16.msra.mxu0 %v1042
    %1055 = vmatpush.bf16.msra.mxu0 %v1041
    %1056 = vmatpush.bf16.msra.mxu0 %v1040
    %1057 = vmatpush.bf16.msra.mxu0 %v1039
    %1058 = vmatpush.bf16.msra.mxu0 %v1038
    %1059 = vmatpush.bf16.msra.mxu0 %v1037
    %1060 = vmatpush.bf16.msra.mxu0 %v1036
    %1061 = vmatpush.bf16.msra.mxu0 %v1035
    %1062 = vmatmul.bf16.gmra.mxu0 %v986
    %v1063 = vpop.f32.mrf.mxu0
    %v1064 = vadd.f32 %v1052, %v1063
    %v1065 = vpop.f32.mrf.mxu0
    %v1066 = vadd.f32 %v1052, %v1065
    %1067 = vdwg.mxu0
    %v1068 = vadd.f32 %v946, %v1064
    %v1069 = vadd.f32 %v947, %v1066
    %v1070 = vld [vmem:[#allocation2 + $0x27] sm:$0x1]
    %v1071 = vsel %vm87, %v1068, 0.0
    %1072 = vadd.xlane.f32.xlu0 %v1071
    %v1073 = vpop.xlane.xlu0 %1072
    %v1074 = vsel %vm87, %v1069, 0.0
    %1075 = vadd.xlane.f32.xlu0 %v1074
    %v1076 = vpop.xlane.xlu0 %1075
    %v1077 = vmul.f32 %v1073, %v407
    %v1078 = vmul.f32 %v1076, %v407
    %v1079 = vmul.f32 %v1068, %v1068
    %v1080 = vmul.f32 %v1069, %v1069
    %v1081 = vsel %vm87, %v1079, 0.0
    %1082 = vadd.xlane.f32.xlu0 %v1081
    %v1083 = vpop.xlane.xlu0 %1082
    %v1084 = vsel %vm87, %v1080, 0.0
    %1085 = vadd.xlane.f32.xlu0 %v1084
    %v1086 = vpop.xlane.xlu0 %1085
    %v1087 = vmul.f32 %v1083, %v407
    %v1088 = vmul.f32 %v1086, %v407
    %v1089 = vsub.f32 %v1068, %v1077
    %v1090 = vsub.f32 %v1069, %v1078
    %v1091 = vmul.f32 %v1077, %v1077
    %v1092 = vmul.f32 %v1078, %v1078
    %v1093 = vsub.f32 %v1087, %v1091
    %v1094 = vsub.f32 %v1088, %v1092
    %v1095 = vadd.f32 %v1093, 1e-05
    %v1096 = vadd.f32 %v1094, 1e-05
    %v1097 = vrsqrt.pop %v1095
    %v1098 = vmul.f32 %v1097, %v1095
    %v1099 = vmul.f32 %v1098, %v1097
    %v1100 = vmul.f32 0.5, %v1099
    %v1101 = vsub.f32 1.5, %v1100
    %v1102 = vmul.f32 %v1097, %v1101
    %vm1103 = vweird.f32 %v1095
    %vm1104 = vweird.f32 %v1097
    %vm1105 = vmor %vm1103, %vm1104
    %v1106 = vsel %vm1105, %v1097, %v1102
    %v1107 = vrsqrt.pop %v1096
    %v1108 = vmul.f32 %v1107, %v1096
    %v1109 = vmul.f32 %v1108, %v1107
    %v1110 = vmul.f32 0.5, %v1109
    %v1111 = vsub.f32 1.5, %v1110
    %v1112 = vmul.f32 %v1107, %v1111
    %vm1113 = vweird.f32 %v1096
    %vm1114 = vweird.f32 %v1107
    %vm1115 = vmor %vm1113, %vm1114
    %v1116 = vsel %vm1115, %v1107, %v1112
    %v1117 = vmul.f32 %v1089, %v1106
    %v1118 = vmul.f32 %v1090, %v1116
    %v1119 = vperm.slane %v1070, 0
    %v1120 = vmul.f32 %v1117, %v1119
    %v1121 = vmul.f32 %v1118, %v1119
    %1123 = vrot.lane.b32.xlu0 %v1119, 96
    %v1124 = vpop.permute.xlu0 %1123
    %v1126 = vadd.f32 %v1120, %v1124
    %v1127 = vadd.f32 %v1121, %v1124
    %v1128 = vld [vmem:[#allocation5 + $0x140] sm:$0x1]
    %v1129 = vpack.c.bf16 %v1127, %v1126
    %v1131 = vsel %vm171, %v1128, 0
    %1133 = vmatpush.bf16.msra.mxu0 0
    %1134 = vmatpush.bf16.msra.mxu0 0
    %1135 = vmatpush.bf16.msra.mxu0 0
    %1136 = vmatpush.bf16.msra.mxu0 0
    %1137 = vmatpush.bf16.msra.mxu0 0
    %1138 = vmatpush.bf16.msra.mxu0 0
    %1139 = vmatpush.bf16.msra.mxu0 0
    %1140 = vmatpush.bf16.msra.mxu0 %v1129
    %1141 = vmatmul.bf16.gmra.mxu0 %v1131
    %v1142 = vpop.f32.mrf.mxu0
    %v1143 = vadd.f32 0.0, %v1142
    %v1144 = vpop.f32.mrf.mxu0
    %1145 = vdwg.mxu0
    %v1146 = vpack.c.bf16 %v1143, %v1143
    %v1147 = vld [vmem:[#allocation5 + $0xf0] sm:$0xf]
    %v1148 = vld [vmem:[#allocation5 + $0xf4] sm:$0xf]
    %v1149 = vld [vmem:[#allocation5 + $0xf8] sm:$0xf]
    %v1150 = vld [vmem:[#allocation5 + $0xfc] sm:$0xf]
    %v1151 = vld [vmem:[#allocation2 + $0x28] sm:$0x1]
    %v1152 = vperm.slane %v1151, 0
    %v1157 = vunpack.c.l.b16 %v1147
    %v1158 = vunpack.c.l.b16 %v1148
    %v1159 = vunpack.c.l.b16 %v1149
    %v1160 = vunpack.c.l.b16 %v1150
    %v1161 = vpack.c.b16 %v1158, %v1157
    %v1162 = vpack.c.b16 %v1160, %v1159
    %v1166 = vsel %vm87, %v1146, 0
    %1168 = vmatpush.bf16.msra.mxu0 0
    %1169 = vmatpush.bf16.msra.mxu0 0
    %1170 = vmatpush.bf16.msra.mxu0 0
    %1171 = vmatpush.bf16.msra.mxu0 0
    %1172 = vmatpush.bf16.msra.mxu0 0
    %1173 = vmatpush.bf16.msra.mxu0 0
    %1174 = vmatpush.bf16.msra.mxu0 %v1162
    %1175 = vmatpush.bf16.msra.mxu0 %v1161
    %1176 = vmatmul.bf16.gmra.mxu0 %v1166
    %v1177 = vpop.f32.mrf.mxu0
    %v1178 = vadd.f32 %v1152, %v1177
    %v1179 = vpop.f32.mrf.mxu0
    %1180 = vdwg.mxu0
    %vm1181 = vcmask 58368
    %1182 = vst.msk [vmem:[#allocation7] sm:$0x3] %vm1181, %v1178
    // Predicated region
    $region22: #{transformer_forward.1} parent=1 // pred_check
      _
    $region23: #{transformer_forward.1} parent=1 // pred_check_branch
      %1184 = sbr.rel (0) target = $region25
    $region24: #{transformer_forward.1} parent=1 // pred_region
      %1186 = vsyncadd [#allocation4], 0
      %s1188 = sshll.u32 [#allocation7], 4
      %s1189 = int_to_ptr.vmem [resolvable:$true] %s1188
      %s1190 = sshll.u32 %s3, 4
      %s1191 = int_to_ptr.hbm [resolvable:$true] %s1190
      %1193 = dma.vmem_to_hbm [thread:$0]  %s1189, 32, %s1191, [#allocation4]
    $region25: #{transformer_forward.1} parent=1 // pred_fallthru
      _
    // Predicated region
    $region26: #{transformer_forward.1} parent=1 // pred_check
      _
    $region27: #{transformer_forward.1} parent=1 // pred_check_branch
      %1195 = sbr.rel (0) target = $region29
    $region28: #{transformer_forward.1} parent=1 // pred_region
      %1197 = dma.done [#allocation4], 32
    $region29: #{transformer_forward.1} parent=1 // pred_fallthru
      _
    %1198 = vsyncpa [#allocation3], 1
    %1199 = vsyncpa [#allocation6], 1
    %1200 = vsyncpa [#allocation4], 1

</llo_original>
